<compile_context>
chip_gen: v7x
topology: tpu7x:2x2x1
jax: 0.10.0
libtpu: 0.0.40
codegen_flags: <defaults>
</compile_context>

<pallas_src>
import jax
import jax.numpy as jnp
from jax import lax
from jax.experimental import pallas as pl
from jax.experimental.pallas import tpu as pltpu


# ------------------------------- Model dims ----------------------------------

NUM_JOINTS_SMPL = 24            # pose joints -> 6D pose dim = 24 * 6 = 144
N_VERTS = 32                    # small synthetic stand-in for 6890
N_KP = 14                       # small synthetic stand-in for SMPL output joints
FEAT_DIM = 32                   # small stand-in for 2048

JP = 128                        # lane-padded component width (one vreg wide)
HEAD_OUT = 7 * JP               # [a1x|a1y|a1z|a2x|a2y|a2z|cam+shape] slabs
SMPL_IN = 10 * JP               # [cam+shape slab | 9 rotmat component slabs]
SMPL_OUT = 4 * JP               # [jx|jy|jz|verts] slabs

# Output slab layout (all offsets 128-aligned -> unmasked stores only).
OFF_CAMSHP = 0                              # cam at [0:3], shape at [3:13]
OFF_RM = JP                                 # 9 slabs, real lanes [0:24] each
OFF_SMPL = OFF_RM + 9 * JP                  # 1280
OFF_J = OFF_SMPL                            # jx / jy / jz at +0, +128, +256 (real [0:14])
OFF_V = OFF_SMPL + 3 * JP                   # verts flat at [0:96]
OFF_KP2D = OFF_SMPL + SMPL_OUT              # kp2d x / y slabs (real [0:14])
OUT_WIDTH = OFF_KP2D + 2 * JP               # 2048

_PARAM_ORDER = ("W1", "b1", "Wh", "bh", "Wsm", "bsm")


# ----------------------------- Fused Pallas kernel ---------------------------

def meva_fused_kernel(x_ref, w1_ref, b1_ref, wh_ref, bh_ref, wsm_ref, bsm_ref,
                      out_ref):
    # ---- 1) hmr.feature_extractor ~ GAP (scale folded into W1) + linear + ReLU
    pooled = jnp.sum(x_ref[...], axis=-1)                       # (tn, C), XLU reduce
    feat = (jnp.dot(pooled.astype(jnp.bfloat16), w1_ref[...],
                    preferred_element_type=jnp.float32) + b1_ref[...])
    feat = jnp.maximum(feat, 0.0)

    # ---- 2) fused heads: one lane-dense dot; 128-lane component slabs --------
    head = (jnp.dot(feat.astype(jnp.bfloat16), wh_ref[...],
                    preferred_element_type=jnp.float32) + bh_ref[...])
    a1x = head[:, 0 * JP:1 * JP]; a1y = head[:, 1 * JP:2 * JP]; a1z = head[:, 2 * JP:3 * JP]
    a2x = head[:, 3 * JP:4 * JP]; a2y = head[:, 4 * JP:5 * JP]; a2z = head[:, 5 * JP:6 * JP]
    camshp = head[:, 6 * JP:7 * JP]          # cam at [0:3], shape at [3:13], zeros after

    # ---- 3) convert_orth_6d_to_mat: Gram-Schmidt, rsqrt on the EUP -----------
    # Padding lanes (24:128 of each slab) are exactly zero -> produce zeros.
    inv1 = lax.rsqrt(a1x * a1x + a1y * a1y + a1z * a1z + 1e-8)
    b1x = a1x * inv1; b1y = a1y * inv1; b1z = a1z * inv1
    d = b1x * a2x + b1y * a2y + b1z * a2z
    c2x = a2x - d * b1x; c2y = a2y - d * b1y; c2z = a2z - d * b1z
    inv2 = lax.rsqrt(c2x * c2x + c2y * c2y + c2z * c2z + 1e-8)
    b2x = c2x * inv2; b2y = c2y * inv2; b2z = c2z * inv2
    b3x = b1y * b2z - b1z * b2y
    b3y = b1z * b2x - b1x * b2z
    b3z = b1x * b2y - b1y * b2x

    # Rotation columns are (b1, b2, b3); component slab r*3+c holds R[r, c].
    # Built in registers (no VMEM store/read-back before the SMPL dot).
    rm = jnp.concatenate([b1x, b2x, b3x, b1y, b2y, b3y, b1z, b2z, b3z], axis=-1)

    # ---- 4) SMPL (linear blend approximation): ONE fused dot -----------------
    smpl_in = jnp.concatenate([camshp, rm], axis=-1).astype(jnp.bfloat16)   # (tn, 1280)
    smpl = (jnp.dot(smpl_in, wsm_ref[...],
                    preferred_element_type=jnp.float32) + bsm_ref[...])     # (tn, 512)
    jx = smpl[:, 0 * JP:1 * JP]
    jy = smpl[:, 1 * JP:2 * JP]
    jz = smpl[:, 2 * JP:3 * JP]

    # ---- 5) projection (identity R, f=5000, center 0, /112 scale) ------------
    s = camshp[:, 0:1]; tx = camshp[:, 1:2]; ty = camshp[:, 2:3]
    tz = 2.0 * 5000.0 / (224.0 * s + 1e-9)
    denom = jz + tz
    # Guard against the synthetic-weight corner case where jz + tz ~ 0.
    denom = jnp.where(jnp.abs(denom) < 1e-6,
                      jnp.where(denom >= 0.0, 1e-6, -1e-6), denom)
    inv_z = pl.reciprocal(denom, approx=True)                   # EUP, ~free
    scale = 5000.0 / (224.0 / 2.0)                               # folded focal / (224/2)
    kp2x = scale * (jx + tx) * inv_z
    kp2y = scale * (jy + ty) * inv_z

    # ---- 6) one lane-dense output slab; all stores 128-aligned & unmasked ----
    out_ref[:, OFF_CAMSHP:OFF_CAMSHP + JP] = camshp
    out_ref[:, OFF_RM:OFF_RM + 9 * JP] = rm
    out_ref[:, OFF_SMPL:OFF_SMPL + SMPL_OUT] = smpl
    out_ref[:, OFF_KP2D:OFF_KP2D + JP] = kp2x
    out_ref[:, OFF_KP2D + JP:OFF_KP2D + 2 * JP] = kp2y


# ------------------------------ Pallas wrapper --------------------------------

def _pick_tile(n):
    """Largest N-tile: single block at small N (v5e/v6e sweet spot), 256-row
    tiles at realistic N so v7x's two TensorCores both get 'parallel' blocks."""
    if n <= 256:
        return n
    for tn in (256, 128, 64, 32, 16, 8):
        if n % tn == 0:
            return tn
    return n


def run_meva_kernel(x3d, params, tn):
    n, c, hw = x3d.shape
    grid = (n // tn,)
    full2d = lambda i: (0, 0)

    in_specs = [pl.BlockSpec((tn, c, hw), lambda i: (i, 0, 0))]
    # Weights are small; constant-index blocks. (At real model scale mark these
    # pipeline_mode=pl.Buffered(1) to avoid double-buffering big weights on v7x.)
    in_specs += [pl.BlockSpec(params[k].shape, full2d) for k in _PARAM_ORDER]

    out_shape = jax.ShapeDtypeStruct((n, OUT_WIDTH), jnp.float32)
    out_spec = pl.BlockSpec((tn, OUT_WIDTH), lambda i: (i, 0))

    return pl.pallas_call(
        meva_fused_kernel,
        out_shape=out_shape,
        grid=grid,
        in_specs=in_specs,
        out_specs=out_spec,
        compiler_params=pltpu.CompilerParams(
            dimension_semantics=("parallel",),     # shards N-blocks across TCs on v7x
            vmem_limit_bytes=32 * 1024 * 1024,     # safe on v5e/v6e/v7x
        ),
    )(x3d, *(params[k] for k in _PARAM_ORDER))


# ------------------------------ JAX glue (small) -------------------------------

def rotmat_cm_to_angle_axis(rm):
    """Angle-axis from component-major rotmats (n, 9, 24) -> (n, 72) joint-major.
    # TODO(synk): kornia's singular-angle branches not reproduced."""
    n = rm.shape[0]
    r00, r01, r02 = rm[:, 0], rm[:, 1], rm[:, 2]
    r10, r11, r12 = rm[:, 3], rm[:, 4], rm[:, 5]
    r20, r21, r22 = rm[:, 6], rm[:, 7], rm[:, 8]
    cos = jnp.clip((r00 + r11 + r22 - 1.0) * 0.5, -1.0 + 1e-7, 1.0 - 1e-7)
    angle = jnp.arccos(cos)
    k = angle / (2.0 * jnp.sin(angle) + 1e-8)
    ax = (r21 - r12) * k
    ay = (r02 - r20) * k
    az = (r10 - r01) * k
    return jnp.stack([ax, ay, az], axis=-1).reshape(n, NUM_JOINTS_SMPL * 3)


# ------------------------------- Model setup ----------------------------------

def init_params(c, hw):
    """Synthetic weights, pre-packed into the fused / lane-padded layouts."""
    keys = jax.random.split(jax.random.PRNGKey(42), 14)
    s = 0.05
    J, K, V = NUM_JOINTS_SMPL, N_KP, N_VERTS

    def rn(k, shape):
        return s * jax.random.normal(k, shape, jnp.float32)

    # Backbone: 1/(H*W) GAP scale folded into W1.
    W1 = (rn(keys[0], (c, FEAT_DIM)) / float(hw)).astype(jnp.bfloat16)
    b1 = rn(keys[1], (1, FEAT_DIM))

    # Fused head weight: 6 pose6d component slabs + [cam|shape] slab, zero padding.
    Wh = jnp.zeros((FEAT_DIM, HEAD_OUT), jnp.float32)
    bh = jnp.zeros((1, HEAD_OUT), jnp.float32)
    Wp = rn(keys[2], (FEAT_DIM, 6, J)); bp = rn(keys[3], (1, 6, J))
    for comp in range(6):
        Wh = Wh.at[:, comp * JP:comp * JP + J].set(Wp[:, comp])
        bh = bh.at[:, comp * JP:comp * JP + J].set(bp[:, comp])
    Wc = rn(keys[4], (FEAT_DIM, 3)); bc = rn(keys[5], (1, 3))
    Ws = rn(keys[6], (FEAT_DIM, 10)); bs = rn(keys[7], (1, 10))
    Wh = Wh.at[:, 6 * JP:6 * JP + 3].set(Wc).at[:, 6 * JP + 3:6 * JP + 13].set(Ws)
    bh = bh.at[:, 6 * JP:6 * JP + 3].set(bc).at[:, 6 * JP + 3:6 * JP + 13].set(bs)
    Wh = Wh.astype(jnp.bfloat16)

    # Fused SMPL weight: rows = [cam|shape|pad slab, 9 rotmat component slabs],
    # cols = [jx|jy|jz|verts] slabs. Rows for cam / padding lanes stay zero so
    # verts & joints depend only on (betas, rotmat), as in the real SMPL.
    Wsm = jnp.zeros((SMPL_IN, SMPL_OUT), jnp.float32)
    bsm = jnp.zeros((1, SMPL_OUT), jnp.float32)
    Wsj = rn(keys[8], (10, 3, K))
    Wsv = rn(keys[9], (10, V * 3))
    Wpj = rn(keys[10], (9, J, 3, K))
    Wpv = rn(keys[11], (9, J, V * 3))
    bj = rn(keys[12], (1, 3, K))
    bv = rn(keys[13], (1, V * 3))
    for comp3 in range(3):                       # joint x / y / z columns
        col0 = comp3 * JP
        Wsm = Wsm.at[3:13, col0:col0 + K].set(Wsj[:, comp3])
        bsm = bsm.at[:, col0:col0 + K].set(bj[:, comp3])
        for rc in range(9):                      # rotmat component rows
            row0 = JP + rc * JP
            Wsm = Wsm.at[row0:row0 + J, col0:col0 + K].set(Wpj[rc, :, comp3])
    vcol0 = 3 * JP                               # verts columns
    Wsm = Wsm.at[3:13, vcol0:vcol0 + V * 3].set(Wsv)
    bsm = bsm.at[:, vcol0:vcol0 + V * 3].set(bv)
    for rc in range(9):
        row0 = JP + rc * JP
        Wsm = Wsm.at[row0:row0 + J, vcol0:vcol0 + V * 3].set(Wpv[rc])
    Wsm = Wsm.astype(jnp.bfloat16)

    return dict(W1=W1, b1=b1, Wh=Wh, bh=bh, Wsm=Wsm, bsm=bsm)


# ------------------------------- Full forward ----------------------------------

@jax.jit
def meva_demo_forward(x, params):
    """x: (B, T, C, H, W) float32, NCHW per frame (PyTorch convention)."""
    b, t, c, h, w = x.shape
    n = b * t
    tn = _pick_tile(n)

    # NCHW flatten to (N, C, H*W): no transpose; GAP happens in-kernel.
    x3d = x.reshape(n, c, h * w)

    slab = run_meva_kernel(x3d, params, tn)        # (n, 2048) lane-dense output

    # Layout plumbing on the (tiny) final outputs only.
    cam = slab[:, 0:3]
    shp = slab[:, 3:13]
    rm = slab[:, OFF_RM:OFF_RM + 9 * JP].reshape(n, 9, JP)[:, :, :NUM_JOINTS_SMPL]
    jx = slab[:, OFF_J + 0 * JP:OFF_J + 0 * JP + N_KP]
    jy = slab[:, OFF_J + 1 * JP:OFF_J + 1 * JP + N_KP]
    jz = slab[:, OFF_J + 2 * JP:OFF_J + 2 * JP + N_KP]
    verts = slab[:, OFF_V:OFF_V + N_VERTS * 3].reshape(n, N_VERTS, 3)
    k2x = slab[:, OFF_KP2D:OFF_KP2D + N_KP]
    k2y = slab[:, OFF_KP2D + JP:OFF_KP2D + JP + N_KP]

    pred_rotmat = rm.reshape(n, 3, 3, NUM_JOINTS_SMPL).transpose(0, 3, 1, 2)
    pose = rotmat_cm_to_angle_axis(rm)                              # (n, 72)
    theta = jnp.concatenate([cam, pose, shp], axis=1)               # (n, 85)
    pred_joints = jnp.stack([jx, jy, jz], axis=-1)                  # (n, 14, 3)
    pred_kp2d = jnp.stack([k2x, k2y], axis=-1)                      # (n, 14, 2)

    out = {
        "theta": theta.reshape(b, t, -1),
        "verts": verts.reshape(b, t, -1, 3),
        "kp_2d": pred_kp2d.reshape(b, t, -1, 2),
        "kp_3d": pred_joints.reshape(b, t, -1, 3),
        "rotmat": pred_rotmat.reshape(b, t, -1, 3, 3),
    }
    return [out]


# ----------------------------------- main --------------------------------------

if __name__ == "__main__":
    B, T, C, H, W = 2, 8, 4, 16, 16
    x = jax.random.normal(jax.random.PRNGKey(0), (B, T, C, H, W), jnp.float32)

    params = init_params(C, H * W)
    smpl_output = meva_demo_forward(x, params)
    smpl_output = jax.block_until_ready(smpl_output)

    s = smpl_output[0]
    assert s["theta"].shape == (B, T, 85)
    assert s["verts"].shape == (B, T, N_VERTS, 3)
    assert s["kp_2d"].shape == (B, T, N_KP, 2)
    assert s["kp_3d"].shape == (B, T, N_KP, 3)
    assert s["rotmat"].shape == (B, T, 24, 3, 3)
    assert all(bool(jnp.all(jnp.isfinite(v))) for v in s.values())
    print("KERNEL_OK")
</pallas_src>

<mosaic_0001>
module attributes {stable_mosaic.version = 11 : i64} {
  func.func @meva_fused_kernel(%arg0: i32, %arg1: memref<16x4x256xf32, #tpu.memory_space<vmem>>, %arg2: memref<4x32xbf16, #tpu.memory_space<vmem>>, %arg3: memref<1x32xf32, #tpu.memory_space<vmem>>, %arg4: memref<32x896xbf16, #tpu.memory_space<vmem>>, %arg5: memref<1x896xf32, #tpu.memory_space<vmem>>, %arg6: memref<1280x512xbf16, #tpu.memory_space<vmem>>, %arg7: memref<1x512xf32, #tpu.memory_space<vmem>>, %arg8: memref<16x2048xf32, #tpu.memory_space<vmem>>) attributes {dimension_semantics = [#tpu.dimension_semantics<parallel>], iteration_bounds = array<i64: 1>, scalar_prefetch = 0 : i64, scratch_operands = 0 : i64, tpu.core_type = #tpu.core_type<tc>, window_params = [{transform_indices = @transform_0, window_bounds = array<i64: 16, 4, 256>}, {pipeline_mode = #tpu.pipeline_mode<synchronous>, transform_indices = @transform_1, window_bounds = array<i64: 4, 32>}, {pipeline_mode = #tpu.pipeline_mode<synchronous>, transform_indices = @transform_2, window_bounds = array<i64: 1, 32>}, {pipeline_mode = #tpu.pipeline_mode<synchronous>, transform_indices = @transform_3, window_bounds = array<i64: 32, 896>}, {pipeline_mode = #tpu.pipeline_mode<synchronous>, transform_indices = @transform_4, window_bounds = array<i64: 1, 896>}, {pipeline_mode = #tpu.pipeline_mode<synchronous>, transform_indices = @transform_5, window_bounds = array<i64: 1280, 512>}, {pipeline_mode = #tpu.pipeline_mode<synchronous>, transform_indices = @transform_6, window_bounds = array<i64: 1, 512>}, {transform_indices = @transform_7, window_bounds = array<i64: 16, 2048>}]} {
    %c0 = arith.constant 0 : index
    %c0_0 = arith.constant 0 : index
    %c0_1 = arith.constant 0 : index
    %0 = vector.load %arg1[%c0, %c0_0, %c0_1] : memref<16x4x256xf32, #tpu.memory_space<vmem>>, vector<16x4x256xf32>
    %cst = arith.constant dense<0.000000e+00> : vector<16x4xf32>
    %1 = vector.multi_reduction <add>, %0, %cst [2] : vector<16x4x256xf32> to vector<16x4xf32>
    %2 = arith.truncf %1 : vector<16x4xf32> to vector<16x4xbf16>
    %c0_2 = arith.constant 0 : index
    %c0_3 = arith.constant 0 : index
    %3 = vector.load %arg2[%c0_2, %c0_3] : memref<4x32xbf16, #tpu.memory_space<vmem>>, vector<4x32xbf16>
    %cst_4 = arith.constant dense<0.000000e+00> : vector<16x32xf32>
    %4 = tpu.matmul %2, %3, %cst_4 {dimension_numbers = #tpu.dot_dimension_numbers<[1], [0], [0], [1], [0, 0, 1, 1], [], []>} : vector<16x4xbf16>, vector<4x32xbf16>, vector<16x32xf32> -> vector<16x32xf32>
    %c0_5 = arith.constant 0 : index
    %c0_6 = arith.constant 0 : index
    %5 = vector.load %arg3[%c0_5, %c0_6] : memref<1x32xf32, #tpu.memory_space<vmem>>, vector<1x32xf32>
    %6 = vector.broadcast %5 : vector<1x32xf32> to vector<16x32xf32>
    %7 = arith.addf %4, %6 : vector<16x32xf32>
    %cst_7 = arith.constant 0.000000e+00 : f32
    %8 = vector.broadcast %cst_7 : f32 to vector<16x32xf32>
    %9 = arith.maximumf %7, %8 : vector<16x32xf32>
    %10 = arith.truncf %9 : vector<16x32xf32> to vector<16x32xbf16>
    %c0_8 = arith.constant 0 : index
    %c0_9 = arith.constant 0 : index
    %11 = vector.load %arg4[%c0_8, %c0_9] : memref<32x896xbf16, #tpu.memory_space<vmem>>, vector<32x896xbf16>
    %cst_10 = arith.constant dense<0.000000e+00> : vector<16x896xf32>
    %12 = tpu.matmul %10, %11, %cst_10 {dimension_numbers = #tpu.dot_dimension_numbers<[1], [0], [0], [1], [0, 0, 1, 1], [], []>} : vector<16x32xbf16>, vector<32x896xbf16>, vector<16x896xf32> -> vector<16x896xf32>
    %c0_11 = arith.constant 0 : index
    %c0_12 = arith.constant 0 : index
    %13 = vector.load %arg5[%c0_11, %c0_12] : memref<1x896xf32, #tpu.memory_space<vmem>>, vector<1x896xf32>
    %14 = vector.broadcast %13 : vector<1x896xf32> to vector<16x896xf32>
    %15 = arith.addf %12, %14 : vector<16x896xf32>
    %16 = vector.extract_strided_slice %15 {offsets = [0, 0], sizes = [16, 128], strides = [1, 1]} : vector<16x896xf32> to vector<16x128xf32>
    %17 = vector.extract_strided_slice %15 {offsets = [0, 128], sizes = [16, 128], strides = [1, 1]} : vector<16x896xf32> to vector<16x128xf32>
    %18 = vector.extract_strided_slice %15 {offsets = [0, 256], sizes = [16, 128], strides = [1, 1]} : vector<16x896xf32> to vector<16x128xf32>
    %19 = vector.extract_strided_slice %15 {offsets = [0, 384], sizes = [16, 128], strides = [1, 1]} : vector<16x896xf32> to vector<16x128xf32>
    %20 = vector.extract_strided_slice %15 {offsets = [0, 512], sizes = [16, 128], strides = [1, 1]} : vector<16x896xf32> to vector<16x128xf32>
    %21 = vector.extract_strided_slice %15 {offsets = [0, 640], sizes = [16, 128], strides = [1, 1]} : vector<16x896xf32> to vector<16x128xf32>
    %22 = vector.extract_strided_slice %15 {offsets = [0, 768], sizes = [16, 128], strides = [1, 1]} : vector<16x896xf32> to vector<16x128xf32>
    %23 = arith.mulf %16, %16 : vector<16x128xf32>
    %24 = arith.mulf %17, %17 : vector<16x128xf32>
    %25 = arith.addf %23, %24 : vector<16x128xf32>
    %26 = arith.mulf %18, %18 : vector<16x128xf32>
    %27 = arith.addf %25, %26 : vector<16x128xf32>
    %cst_13 = arith.constant 9.99999993E-9 : f32
    %28 = vector.broadcast %cst_13 : f32 to vector<16x128xf32>
    %29 = arith.addf %27, %28 : vector<16x128xf32>
    %30 = math.rsqrt %29 : vector<16x128xf32>
    %31 = arith.mulf %16, %30 : vector<16x128xf32>
    %32 = arith.mulf %17, %30 : vector<16x128xf32>
    %33 = arith.mulf %18, %30 : vector<16x128xf32>
    %34 = arith.mulf %31, %19 : vector<16x128xf32>
    %35 = arith.mulf %32, %20 : vector<16x128xf32>
    %36 = arith.addf %34, %35 : vector<16x128xf32>
    %37 = arith.mulf %33, %21 : vector<16x128xf32>
    %38 = arith.addf %36, %37 : vector<16x128xf32>
    %39 = arith.mulf %38, %31 : vector<16x128xf32>
    %40 = arith.subf %19, %39 : vector<16x128xf32>
    %41 = arith.mulf %38, %32 : vector<16x128xf32>
    %42 = arith.subf %20, %41 : vector<16x128xf32>
    %43 = arith.mulf %38, %33 : vector<16x128xf32>
    %44 = arith.subf %21, %43 : vector<16x128xf32>
    %45 = arith.mulf %40, %40 : vector<16x128xf32>
    %46 = arith.mulf %42, %42 : vector<16x128xf32>
    %47 = arith.addf %45, %46 : vector<16x128xf32>
    %48 = arith.mulf %44, %44 : vector<16x128xf32>
    %49 = arith.addf %47, %48 : vector<16x128xf32>
    %cst_14 = arith.constant 9.99999993E-9 : f32
    %50 = vector.broadcast %cst_14 : f32 to vector<16x128xf32>
    %51 = arith.addf %49, %50 : vector<16x128xf32>
    %52 = math.rsqrt %51 : vector<16x128xf32>
    %53 = arith.mulf %40, %52 : vector<16x128xf32>
    %54 = arith.mulf %42, %52 : vector<16x128xf32>
    %55 = arith.mulf %44, %52 : vector<16x128xf32>
    %56 = arith.mulf %32, %55 : vector<16x128xf32>
    %57 = arith.mulf %33, %54 : vector<16x128xf32>
    %58 = arith.subf %56, %57 : vector<16x128xf32>
    %59 = arith.mulf %33, %53 : vector<16x128xf32>
    %60 = arith.mulf %31, %55 : vector<16x128xf32>
    %61 = arith.subf %59, %60 : vector<16x128xf32>
    %62 = arith.mulf %31, %54 : vector<16x128xf32>
    %63 = arith.mulf %32, %53 : vector<16x128xf32>
    %64 = arith.subf %62, %63 : vector<16x128xf32>
    %65 = tpu.concatenate %31, %53, %58, %32, %54, %61, %33, %55, %64 in 1 : vector<16x128xf32>, vector<16x128xf32>, vector<16x128xf32>, vector<16x128xf32>, vector<16x128xf32>, vector<16x128xf32>, vector<16x128xf32>, vector<16x128xf32>, vector<16x128xf32> -> vector<16x1152xf32>
    %66 = tpu.concatenate %22, %65 in 1 : vector<16x128xf32>, vector<16x1152xf32> -> vector<16x1280xf32>
    %67 = arith.truncf %66 : vector<16x1280xf32> to vector<16x1280xbf16>
    %c0_15 = arith.constant 0 : index
    %c0_16 = arith.constant 0 : index
    %68 = vector.load %arg6[%c0_15, %c0_16] : memref<1280x512xbf16, #tpu.memory_space<vmem>>, vector<1280x512xbf16>
    %cst_17 = arith.constant dense<0.000000e+00> : vector<16x512xf32>
    %69 = tpu.matmul %67, %68, %cst_17 {dimension_numbers = #tpu.dot_dimension_numbers<[1], [0], [0], [1], [0, 0, 1, 1], [], []>} : vector<16x1280xbf16>, vector<1280x512xbf16>, vector<16x512xf32> -> vector<16x512xf32>
    %c0_18 = arith.constant 0 : index
    %c0_19 = arith.constant 0 : index
    %70 = vector.load %arg7[%c0_18, %c0_19] : memref<1x512xf32, #tpu.memory_space<vmem>>, vector<1x512xf32>
    %71 = vector.broadcast %70 : vector<1x512xf32> to vector<16x512xf32>
    %72 = arith.addf %69, %71 : vector<16x512xf32>
    %73 = vector.extract_strided_slice %72 {offsets = [0, 0], sizes = [16, 128], strides = [1, 1]} : vector<16x512xf32> to vector<16x128xf32>
    %74 = vector.extract_strided_slice %72 {offsets = [0, 128], sizes = [16, 128], strides = [1, 1]} : vector<16x512xf32> to vector<16x128xf32>
    %75 = vector.extract_strided_slice %72 {offsets = [0, 256], sizes = [16, 128], strides = [1, 1]} : vector<16x512xf32> to vector<16x128xf32>
    %76 = vector.extract_strided_slice %22 {offsets = [0, 0], sizes = [16, 1], strides = [1, 1]} : vector<16x128xf32> to vector<16x1xf32>
    %77 = vector.extract_strided_slice %22 {offsets = [0, 1], sizes = [16, 1], strides = [1, 1]} : vector<16x128xf32> to vector<16x1xf32>
    %78 = vector.extract_strided_slice %22 {offsets = [0, 2], sizes = [16, 1], strides = [1, 1]} : vector<16x128xf32> to vector<16x1xf32>
    %cst_20 = arith.constant 2.240000e+02 : f32
    %79 = vector.broadcast %cst_20 : f32 to vector<16x1xf32>
    %80 = arith.mulf %79, %76 : vector<16x1xf32>
    %cst_21 = arith.constant 9.99999971E-10 : f32
    %81 = vector.broadcast %cst_21 : f32 to vector<16x1xf32>
    %82 = arith.addf %80, %81 : vector<16x1xf32>
    %cst_22 = arith.constant 1.000000e+04 : f32
    %83 = vector.broadcast %cst_22 : f32 to vector<16x1xf32>
    %84 = arith.divf %83, %82 : vector<16x1xf32>
    %85 = vector.broadcast %84 : vector<16x1xf32> to vector<16x128xf32>
    %86 = arith.addf %75, %85 : vector<16x128xf32>
    %87 = math.absf %86 : vector<16x128xf32>
    %cst_23 = arith.constant 9.99999997E-7 : f32
    %88 = vector.broadcast %cst_23 : f32 to vector<16x128xf32>
    %89 = arith.cmpf olt, %87, %88 : vector<16x128xf32>
    %cst_24 = arith.constant 0.000000e+00 : f32
    %90 = vector.broadcast %cst_24 : f32 to vector<16x128xf32>
    %91 = arith.cmpf oge, %86, %90 : vector<16x128xf32>
    %cst_25 = arith.constant 9.99999997E-7 : f32
    %cst_26 = arith.constant -9.99999997E-7 : f32
    %92 = vector.broadcast %cst_25 : f32 to vector<16x128xf32>
    %93 = vector.broadcast %cst_26 : f32 to vector<16x128xf32>
    %94 = arith.select %91, %92, %93 : vector<16x128xi1>, vector<16x128xf32>
    %95 = arith.select %89, %94, %86 : vector<16x128xi1>, vector<16x128xf32>
    %96 = tpu.reciprocal %95 {approx = true} : vector<16x128xf32> -> vector<16x128xf32>
    %97 = vector.broadcast %77 : vector<16x1xf32> to vector<16x128xf32>
    %98 = arith.addf %73, %97 : vector<16x128xf32>
    %cst_27 = arith.constant 44.6428566 : f32
    %99 = vector.broadcast %cst_27 : f32 to vector<16x128xf32>
    %100 = arith.mulf %99, %98 : vector<16x128xf32>
    %101 = arith.mulf %100, %96 : vector<16x128xf32>
    %102 = vector.broadcast %78 : vector<16x1xf32> to vector<16x128xf32>
    %103 = arith.addf %74, %102 : vector<16x128xf32>
    %cst_28 = arith.constant 44.6428566 : f32
    %104 = vector.broadcast %cst_28 : f32 to vector<16x128xf32>
    %105 = arith.mulf %104, %103 : vector<16x128xf32>
    %106 = arith.mulf %105, %96 : vector<16x128xf32>
    %c0_29 = arith.constant 0 : index
    %c0_30 = arith.constant 0 : index
    %107 = vector.load %arg8[%c0_29, %c0_30] : memref<16x2048xf32, #tpu.memory_space<vmem>>, vector<16x128xf32>
    tpu.vector_store %arg8[%c0_29, %c0_30], %22 {strides = array<i32>} : memref<16x2048xf32, #tpu.memory_space<vmem>>, vector<16x128xf32>,
    %c0_31 = arith.constant 0 : index
    %c128 = arith.constant 128 : index
    %108 = vector.load %arg8[%c0_31, %c128] : memref<16x2048xf32, #tpu.memory_space<vmem>>, vector<16x1152xf32>
    tpu.vector_store %arg8[%c0_31, %c128], %65 {strides = array<i32>} : memref<16x2048xf32, #tpu.memory_space<vmem>>, vector<16x1152xf32>,
    %c0_32 = arith.constant 0 : index
    %c1280 = arith.constant 1280 : index
    %109 = vector.load %arg8[%c0_32, %c1280] : memref<16x2048xf32, #tpu.memory_space<vmem>>, vector<16x512xf32>
    tpu.vector_store %arg8[%c0_32, %c1280], %72 {strides = array<i32>} : memref<16x2048xf32, #tpu.memory_space<vmem>>, vector<16x512xf32>,
    %c0_33 = arith.constant 0 : index
    %c1792 = arith.constant 1792 : index
    %110 = vector.load %arg8[%c0_33, %c1792] : memref<16x2048xf32, #tpu.memory_space<vmem>>, vector<16x128xf32>
    tpu.vector_store %arg8[%c0_33, %c1792], %101 {strides = array<i32>} : memref<16x2048xf32, #tpu.memory_space<vmem>>, vector<16x128xf32>,
    %c0_34 = arith.constant 0 : index
    %c1920 = arith.constant 1920 : index
    %111 = vector.load %arg8[%c0_34, %c1920] : memref<16x2048xf32, #tpu.memory_space<vmem>>, vector<16x128xf32>
    tpu.vector_store %arg8[%c0_34, %c1920], %106 {strides = array<i32>} : memref<16x2048xf32, #tpu.memory_space<vmem>>, vector<16x128xf32>,
    return
  }
  func.func @transform_0(%arg0: i32) -> (i32, i32, i32) {
    %c0_i32 = arith.constant 0 : i32
    %c0_i32_0 = arith.constant 0 : i32
    %c0_i32_1 = arith.constant 0 : i32
    return %arg0, %c0_i32, %c0_i32_0 : i32, i32, i32
  }
  func.func @transform_1(%arg0: i32) -> (i32, i32) {
    %c0_i32 = arith.constant 0 : i32
    %c0_i32_0 = arith.constant 0 : i32
    %c0_i32_1 = arith.constant 0 : i32
    return %c0_i32, %c0_i32_0 : i32, i32
  }
  func.func @transform_2(%arg0: i32) -> (i32, i32) {
    %c0_i32 = arith.constant 0 : i32
    %c0_i32_0 = arith.constant 0 : i32
    %c0_i32_1 = arith.constant 0 : i32
    return %c0_i32, %c0_i32_0 : i32, i32
  }
  func.func @transform_3(%arg0: i32) -> (i32, i32) {
    %c0_i32 = arith.constant 0 : i32
    %c0_i32_0 = arith.constant 0 : i32
    %c0_i32_1 = arith.constant 0 : i32
    return %c0_i32, %c0_i32_0 : i32, i32
  }
  func.func @transform_4(%arg0: i32) -> (i32, i32) {
    %c0_i32 = arith.constant 0 : i32
    %c0_i32_0 = arith.constant 0 : i32
    %c0_i32_1 = arith.constant 0 : i32
    return %c0_i32, %c0_i32_0 : i32, i32
  }
  func.func @transform_5(%arg0: i32) -> (i32, i32) {
    %c0_i32 = arith.constant 0 : i32
    %c0_i32_0 = arith.constant 0 : i32
    %c0_i32_1 = arith.constant 0 : i32
    return %c0_i32, %c0_i32_0 : i32, i32
  }
  func.func @transform_6(%arg0: i32) -> (i32, i32) {
    %c0_i32 = arith.constant 0 : i32
    %c0_i32_0 = arith.constant 0 : i32
    %c0_i32_1 = arith.constant 0 : i32
    return %c0_i32, %c0_i32_0 : i32, i32
  }
  func.func @transform_7(%arg0: i32) -> (i32, i32) {
    %c0_i32 = arith.constant 0 : i32
    %c0_i32_0 = arith.constant 0 : i32
    return %arg0, %c0_i32 : i32, i32
  }
}

</mosaic_0001>

<llo_original>
// kernel: meva_demo_forward.1
$region0: #{meva_demo_forward.1}
  #allocation0 [shape = 'u32[]', space=smem, size = 0x4, offset = 0x4, fixed_abs, tag = 'smem constant byte address 0x4 - core index']
  #allocation1 [shape = 'u32[144,128]{1,0:T(1,128)}', space=vmem, size = 0x12000, scoped, tag = 'internal scratch']
  %s0 = inlined_call_operand.vmem [shape: f32[16,4,256], index: 0, kind: input, shape index: {}]
  %s1 = inlined_call_operand.hbm [shape: bf16[4,32], index: 1, kind: input, shape index: {}]
  %s2 = inlined_call_operand.hbm [shape: f32[1,32], index: 2, kind: input, shape index: {}]
  %s3 = inlined_call_operand.hbm [shape: bf16[32,896], index: 3, kind: input, shape index: {}]
  %s4 = inlined_call_operand.hbm [shape: f32[1,896], index: 4, kind: input, shape index: {}]
  %s5 = inlined_call_operand.hbm [shape: bf16[1280,512], index: 5, kind: input, shape index: {}]
  %s6 = inlined_call_operand.hbm [shape: f32[1,512], index: 6, kind: input, shape index: {}]
  %s7 = inlined_call_operand.vmem [shape: f32[16,2048], index: 7, kind: output, shape index: {}]
  %s8 = sld [smem:[#allocation0]]
  $region62: #{meva_demo_forward.1} parent=0
    _
  %s10 = ssub.s32 1, %s8
  %s11 = scalar_select 0, %s10, %s8
  $region1: #{meva_demo_forward.1} parent=0
    #allocation2 [shape = 'u8[1024]{0}', space=vmem, size = 0x400, scoped, tag = 'input window, operand 1, single buffered']
    #allocation3 [shape = 's32[1]{0}', space=sflag, size = 0x4, scoped, tag = 'scoped memory for meva_demo_forward.1']
    #allocation4 [shape = 'u8[512]{0}', space=vmem, size = 0x400, scoped, tag = 'input window, operand 2, single buffered']
    #allocation5 [shape = 's32[1]{0}', space=sflag, size = 0x4, scoped, tag = 'scoped memory for meva_demo_forward.1']
    #allocation6 [shape = 'u8[57344]{0}', space=vmem, size = 0xe000, scoped, tag = 'input window, operand 3, single buffered']
    #allocation7 [shape = 'u8[3584]{0}', space=vmem, size = 0x1000, scoped, tag = 'input window, operand 4, single buffered']
    #allocation8 [shape = 's32[1]{0}', space=sflag, size = 0x4, scoped, tag = 'scoped memory for meva_demo_forward.1']
    #allocation9 [shape = 'u8[1310720]{0}', space=vmem, size = 0x140000, scoped, tag = 'input window, operand 5, single buffered']
    #allocation10 [shape = 'u8[2048]{0}', space=vmem, size = 0x800, scoped, tag = 'input window, operand 6, single buffered']
    #allocation11 [shape = 's32[1]{0}', space=sflag, size = 0x4, scoped, tag = 'scoped memory for meva_demo_forward.1']
    %12 = vsyncpa [#allocation3], 0
    %13 = vsyncpa [#allocation5], 0
    %14 = vsyncpa [#allocation8], 0
    %15 = vsyncpa [#allocation11], 0
    // Predicated region
    $region2: #{meva_demo_forward.1} parent=1 // pred_check
      _
    $region3: #{meva_demo_forward.1} parent=1 // pred_check_branch
      %17 = sbr.rel (0) target = $region5
    $region4: #{meva_demo_forward.1} parent=1 // pred_region
      _
    $region5: #{meva_demo_forward.1} parent=1 // pred_fallthru
      _
    // Predicated region
    $region6: #{meva_demo_forward.1} parent=1 // pred_check
      _
    $region7: #{meva_demo_forward.1} parent=1 // pred_check_branch
      %19 = sbr.rel (0) target = $region9
    $region8: #{meva_demo_forward.1} parent=1 // pred_region
      %s21 = ssub.s32 32, 32
      %22 = vsyncadd [#allocation3], %s21
      %s24 = sshll.u32 [#allocation2], 4
      %s25 = int_to_ptr.vmem [resolvable:$true] %s24
      %27 = dma.hbm_to_vmem [thread:$0]  %s1, 32, %s25, [#allocation3]
    $region9: #{meva_demo_forward.1} parent=1 // pred_fallthru
      _
    // Predicated region
    $region10: #{meva_demo_forward.1} parent=1 // pred_check
      _
    $region11: #{meva_demo_forward.1} parent=1 // pred_check_branch
      %29 = sbr.rel (0) target = $region13
    $region12: #{meva_demo_forward.1} parent=1 // pred_region
      %s31 = ssub.s32 16, 16
      %32 = vsyncadd [#allocation5], %s31
      %s34 = sshll.u32 [#allocation4], 4
      %s35 = int_to_ptr.vmem [resolvable:$true] %s34
      %37 = dma.hbm_to_vmem [thread:$0]  %s2, 16, %s35, [#allocation5]
    $region13: #{meva_demo_forward.1} parent=1 // pred_fallthru
      _
    // Predicated region
    $region14: #{meva_demo_forward.1} parent=1 // pred_check
      _
    $region15: #{meva_demo_forward.1} parent=1 // pred_check_branch
      %39 = sbr.rel (0) target = $region17
    $region16: #{meva_demo_forward.1} parent=1 // pred_region
      %s41 = ssub.s32 1792, 1792
      %42 = vsyncadd [#allocation5], %s41
      %s43 = sshll.u32 [#allocation6], 4
      %s44 = int_to_ptr.vmem [resolvable:$true] %s43
      %49 = dma.hbm_to_vmem [thread:$0]  %s3, 1792, %s44, [#allocation5], 448, 448, 28
    $region17: #{meva_demo_forward.1} parent=1 // pred_fallthru
      _
    // Predicated region
    $region18: #{meva_demo_forward.1} parent=1 // pred_check
      _
    $region19: #{meva_demo_forward.1} parent=1 // pred_check_branch
      %51 = sbr.rel (0) target = $region21
    $region20: #{meva_demo_forward.1} parent=1 // pred_region
      %s53 = ssub.s32 112, 112
      %54 = vsyncadd [#allocation8], %s53
      %s56 = sshll.u32 [#allocation7], 4
      %s57 = int_to_ptr.vmem [resolvable:$true] %s56
      %59 = dma.hbm_to_vmem [thread:$0]  %s4, 112, %s57, [#allocation8]
    $region21: #{meva_demo_forward.1} parent=1 // pred_fallthru
      _
    // Predicated region
    $region22: #{meva_demo_forward.1} parent=1 // pred_check
      _
    $region23: #{meva_demo_forward.1} parent=1 // pred_check_branch
      %61 = sbr.rel (0) target = $region25
    $region24: #{meva_demo_forward.1} parent=1 // pred_region
      %s63 = ssub.s32 40960, 40960
      %64 = vsyncadd [#allocation8], %s63
      %s65 = sshll.u32 [#allocation9], 4
      %s66 = int_to_ptr.vmem [resolvable:$true] %s65
      %71 = dma.hbm_to_vmem [thread:$0]  %s5, 40960, %s66, [#allocation8], 256, 256, 16
    $region25: #{meva_demo_forward.1} parent=1 // pred_fallthru
      _
    // Predicated region
    $region26: #{meva_demo_forward.1} parent=1 // pred_check
      _
    $region27: #{meva_demo_forward.1} parent=1 // pred_check_branch
      %73 = sbr.rel (0) target = $region29
    $region28: #{meva_demo_forward.1} parent=1 // pred_region
      %s75 = ssub.s32 64, 64
      %76 = vsyncadd [#allocation11], %s75
      %s78 = sshll.u32 [#allocation10], 4
      %s79 = int_to_ptr.vmem [resolvable:$true] %s78
      %81 = dma.hbm_to_vmem [thread:$0]  %s6, 64, %s79, [#allocation11]
    $region29: #{meva_demo_forward.1} parent=1 // pred_fallthru
      _
    // Predicated region
    $region30: #{meva_demo_forward.1} parent=1 // pred_check
      _
    $region31: #{meva_demo_forward.1} parent=1 // pred_check_branch
      %83 = sbr.rel (0) target = $region33
    $region32: #{meva_demo_forward.1} parent=1 // pred_region
      %84 = dma.done [#allocation3], 32
    $region33: #{meva_demo_forward.1} parent=1 // pred_fallthru
      _
    // Predicated region
    $region34: #{meva_demo_forward.1} parent=1 // pred_check
      _
    $region35: #{meva_demo_forward.1} parent=1 // pred_check_branch
      %86 = sbr.rel (0) target = $region37
    $region36: #{meva_demo_forward.1} parent=1 // pred_region
      %87 = dma.done [#allocation5], 16
    $region37: #{meva_demo_forward.1} parent=1 // pred_fallthru
      _
    // Predicated region
    $region38: #{meva_demo_forward.1} parent=1 // pred_check
      _
    $region39: #{meva_demo_forward.1} parent=1 // pred_check_branch
      %89 = sbr.rel (0) target = $region41
    $region40: #{meva_demo_forward.1} parent=1 // pred_region
      %90 = dma.done [#allocation5], 1792
    $region41: #{meva_demo_forward.1} parent=1 // pred_fallthru
      _
    // Predicated region
    $region42: #{meva_demo_forward.1} parent=1 // pred_check
      _
    $region43: #{meva_demo_forward.1} parent=1 // pred_check_branch
      %92 = sbr.rel (0) target = $region45
    $region44: #{meva_demo_forward.1} parent=1 // pred_region
      %93 = dma.done [#allocation8], 112
    $region45: #{meva_demo_forward.1} parent=1 // pred_fallthru
      _
    // Predicated region
    $region46: #{meva_demo_forward.1} parent=1 // pred_check
      _
    $region47: #{meva_demo_forward.1} parent=1 // pred_check_branch
      %95 = sbr.rel (0) target = $region49
    $region48: #{meva_demo_forward.1} parent=1 // pred_region
      %96 = dma.done [#allocation8], 40960
    $region49: #{meva_demo_forward.1} parent=1 // pred_fallthru
      _
    // Predicated region
    $region50: #{meva_demo_forward.1} parent=1 // pred_check
      _
    $region51: #{meva_demo_forward.1} parent=1 // pred_check_branch
      %98 = sbr.rel (0) target = $region53
    $region52: #{meva_demo_forward.1} parent=1 // pred_region
      %99 = dma.done [#allocation11], 64
    $region53: #{meva_demo_forward.1} parent=1 // pred_fallthru
      _
    %v101 = vld [vmem:[%s0] sm:$0xff]
    %v102 = vld [vmem:[%s0 + $0x8] sm:$0xff]
    %v103 = vld [vmem:[%s0 + $0x10] sm:$0xff]
    %v104 = vld [vmem:[%s0 + $0x18] sm:$0xff]
    %v105 = vld [vmem:[%s0 + $0x20] sm:$0xff]
    %v106 = vld [vmem:[%s0 + $0x28] sm:$0xff]
    %v107 = vld [vmem:[%s0 + $0x30] sm:$0xff]
    %v108 = vld [vmem:[%s0 + $0x38] sm:$0xff]
    %v109 = vld [vmem:[%s0 + $0x40] sm:$0xff]
    %v110 = vld [vmem:[%s0 + $0x48] sm:$0xff]
    %v111 = vld [vmem:[%s0 + $0x50] sm:$0xff]
    %v112 = vld [vmem:[%s0 + $0x58] sm:$0xff]
    %v113 = vld [vmem:[%s0 + $0x60] sm:$0xff]
    %v114 = vld [vmem:[%s0 + $0x68] sm:$0xff]
    %v115 = vld [vmem:[%s0 + $0x70] sm:$0xff]
    %v116 = vld [vmem:[%s0 + $0x78] sm:$0xff]
    %v133 = vcombine.high %v101, %v101
    %v134 = vcombine.high %v102, %v102
    %v135 = vcombine.high %v103, %v103
    %v136 = vcombine.high %v104, %v104
    %v137 = vcombine.high %v105, %v105
    %v138 = vcombine.high %v106, %v106
    %v139 = vcombine.high %v107, %v107
    %v140 = vcombine.high %v108, %v108
    %v141 = vcombine.high %v109, %v109
    %v142 = vcombine.high %v110, %v110
    %v143 = vcombine.high %v111, %v111
    %v144 = vcombine.high %v112, %v112
    %v145 = vcombine.high %v113, %v113
    %v146 = vcombine.high %v114, %v114
    %v147 = vcombine.high %v115, %v115
    %v148 = vcombine.high %v116, %v116
    %vm165 = vcmask 1043456
    %v166 = vsel %vm165, %v101, 0.0
    %v167 = vsel %vm165, %v133, 0.0
    %v168 = vadd.f32 %v166, %v167
    %169 = vadd.xlane.f32.xlu0 %v168
    %v170 = vpop.xlane.xlu0 %169
    %v171 = vsel %vm165, %v102, 0.0
    %v172 = vsel %vm165, %v134, 0.0
    %v173 = vadd.f32 %v171, %v172
    %174 = vadd.xlane.f32.xlu0 %v173
    %v175 = vpop.xlane.xlu0 %174
    %v176 = vsel %vm165, %v103, 0.0
    %v177 = vsel %vm165, %v135, 0.0
    %v178 = vadd.f32 %v176, %v177
    %179 = vadd.xlane.f32.xlu0 %v178
    %v180 = vpop.xlane.xlu0 %179
    %v181 = vsel %vm165, %v104, 0.0
    %v182 = vsel %vm165, %v136, 0.0
    %v183 = vadd.f32 %v181, %v182
    %184 = vadd.xlane.f32.xlu0 %v183
    %v185 = vpop.xlane.xlu0 %184
    %v186 = vsel %vm165, %v105, 0.0
    %v187 = vsel %vm165, %v137, 0.0
    %v188 = vadd.f32 %v186, %v187
    %189 = vadd.xlane.f32.xlu0 %v188
    %v190 = vpop.xlane.xlu0 %189
    %v191 = vsel %vm165, %v106, 0.0
    %v192 = vsel %vm165, %v138, 0.0
    %v193 = vadd.f32 %v191, %v192
    %194 = vadd.xlane.f32.xlu0 %v193
    %v195 = vpop.xlane.xlu0 %194
    %v196 = vsel %vm165, %v107, 0.0
    %v197 = vsel %vm165, %v139, 0.0
    %v198 = vadd.f32 %v196, %v197
    %199 = vadd.xlane.f32.xlu0 %v198
    %v200 = vpop.xlane.xlu0 %199
    %v201 = vsel %vm165, %v108, 0.0
    %v202 = vsel %vm165, %v140, 0.0
    %v203 = vadd.f32 %v201, %v202
    %204 = vadd.xlane.f32.xlu0 %v203
    %v205 = vpop.xlane.xlu0 %204
    %v206 = vsel %vm165, %v109, 0.0
    %v207 = vsel %vm165, %v141, 0.0
    %v208 = vadd.f32 %v206, %v207
    %209 = vadd.xlane.f32.xlu0 %v208
    %v210 = vpop.xlane.xlu0 %209
    %v211 = vsel %vm165, %v110, 0.0
    %v212 = vsel %vm165, %v142, 0.0
    %v213 = vadd.f32 %v211, %v212
    %214 = vadd.xlane.f32.xlu0 %v213
    %v215 = vpop.xlane.xlu0 %214
    %v216 = vsel %vm165, %v111, 0.0
    %v217 = vsel %vm165, %v143, 0.0
    %v218 = vadd.f32 %v216, %v217
    %219 = vadd.xlane.f32.xlu0 %v218
    %v220 = vpop.xlane.xlu0 %219
    %v221 = vsel %vm165, %v112, 0.0
    %v222 = vsel %vm165, %v144, 0.0
    %v223 = vadd.f32 %v221, %v222
    %224 = vadd.xlane.f32.xlu0 %v223
    %v225 = vpop.xlane.xlu0 %224
    %v226 = vsel %vm165, %v113, 0.0
    %v227 = vsel %vm165, %v145, 0.0
    %v228 = vadd.f32 %v226, %v227
    %229 = vadd.xlane.f32.xlu0 %v228
    %v230 = vpop.xlane.xlu0 %229
    %v231 = vsel %vm165, %v114, 0.0
    %v232 = vsel %vm165, %v146, 0.0
    %v233 = vadd.f32 %v231, %v232
    %234 = vadd.xlane.f32.xlu0 %v233
    %v235 = vpop.xlane.xlu0 %234
    %v236 = vsel %vm165, %v115, 0.0
    %v237 = vsel %vm165, %v147, 0.0
    %v238 = vadd.f32 %v236, %v237
    %239 = vadd.xlane.f32.xlu0 %v238
    %v240 = vpop.xlane.xlu0 %239
    %v241 = vsel %vm165, %v116, 0.0
    %v242 = vsel %vm165, %v148, 0.0
    %v243 = vadd.f32 %v241, %v242
    %244 = vadd.xlane.f32.xlu0 %v243
    %v245 = vpop.xlane.xlu0 %244
    %v246 = vpack.c.bf16 %v170, %v170
    %v247 = vpack.c.bf16 %v175, %v175
    %v248 = vpack.c.bf16 %v180, %v180
    %v249 = vpack.c.bf16 %v185, %v185
    %v250 = vpack.c.bf16 %v190, %v190
    %v251 = vpack.c.bf16 %v195, %v195
    %v252 = vpack.c.bf16 %v200, %v200
    %v253 = vpack.c.bf16 %v205, %v205
    %v254 = vpack.c.bf16 %v210, %v210
    %v255 = vpack.c.bf16 %v215, %v215
    %v256 = vpack.c.bf16 %v220, %v220
    %v257 = vpack.c.bf16 %v225, %v225
    %v258 = vpack.c.bf16 %v230, %v230
    %v259 = vpack.c.bf16 %v235, %v235
    %v260 = vpack.c.bf16 %v240, %v240
    %v261 = vpack.c.bf16 %v245, %v245
    %v262 = vld [vmem:[#allocation2] sm:$0x3]
    %v263 = vld [vmem:[#allocation4] sm:$0x1]
    %v265 = vlaneseq
    %v266 = vshrl.u32 %v265, 7
    %v267 = vsub.s32 0, %v266
    %v268 = vrot.slane %v263, %v267
    %v286 = vunpack.c.l.b16 %v246
    %v287 = vunpack.c.l.b16 %v247
    %v288 = vunpack.c.l.b16 %v248
    %v289 = vunpack.c.l.b16 %v249
    %v290 = vunpack.c.l.b16 %v250
    %v291 = vunpack.c.l.b16 %v251
    %v292 = vunpack.c.l.b16 %v252
    %v293 = vunpack.c.l.b16 %v253
    %v294 = vunpack.c.l.b16 %v254
    %v295 = vunpack.c.l.b16 %v255
    %v296 = vunpack.c.l.b16 %v256
    %v297 = vunpack.c.l.b16 %v257
    %v298 = vunpack.c.l.b16 %v258
    %v299 = vunpack.c.l.b16 %v259
    %v300 = vunpack.c.l.b16 %v260
    %v301 = vunpack.c.l.b16 %v261
    %v302 = vlaneseq
    %v303 = vand.u32 %v302, 127
    %v304 = vlaneseq
    %v305 = vshrl.u32 %v304, 7
    %v306 = vsub.s32 %v303, %v305
    %v307 = vrot.slane %v286, %v306
    %v308 = vlaneseq
    %v309 = vshrl.u32 %v308, 7
    %v310 = vsub.s32 %v303, %v309
    %v311 = vrot.slane %v287, %v310
    %v312 = vlaneseq
    %v313 = vshrl.u32 %v312, 7
    %v314 = vsub.s32 %v303, %v313
    %v315 = vrot.slane %v288, %v314
    %v316 = vlaneseq
    %v317 = vshrl.u32 %v316, 7
    %v318 = vsub.s32 %v303, %v317
    %v319 = vrot.slane %v289, %v318
    %v320 = vlaneseq
    %v321 = vshrl.u32 %v320, 7
    %v322 = vsub.s32 %v303, %v321
    %v323 = vrot.slane %v290, %v322
    %v324 = vlaneseq
    %v325 = vshrl.u32 %v324, 7
    %v326 = vsub.s32 %v303, %v325
    %v327 = vrot.slane %v291, %v326
    %v328 = vlaneseq
    %v329 = vshrl.u32 %v328, 7
    %v330 = vsub.s32 %v303, %v329
    %v331 = vrot.slane %v292, %v330
    %v332 = vlaneseq
    %v333 = vshrl.u32 %v332, 7
    %v334 = vsub.s32 %v303, %v333
    %v335 = vrot.slane %v293, %v334
    %v336 = vlaneseq
    %v337 = vshrl.u32 %v336, 7
    %v338 = vsub.s32 %v303, %v337
    %v339 = vrot.slane %v294, %v338
    %v340 = vlaneseq
    %v341 = vshrl.u32 %v340, 7
    %v342 = vsub.s32 %v303, %v341
    %v343 = vrot.slane %v295, %v342
    %v344 = vlaneseq
    %v345 = vshrl.u32 %v344, 7
    %v346 = vsub.s32 %v303, %v345
    %v347 = vrot.slane %v296, %v346
    %v348 = vlaneseq
    %v349 = vshrl.u32 %v348, 7
    %v350 = vsub.s32 %v303, %v349
    %v351 = vrot.slane %v297, %v350
    %v352 = vlaneseq
    %v353 = vshrl.u32 %v352, 7
    %v354 = vsub.s32 %v303, %v353
    %v355 = vrot.slane %v298, %v354
    %v356 = vlaneseq
    %v357 = vshrl.u32 %v356, 7
    %v358 = vsub.s32 %v303, %v357
    %v359 = vrot.slane %v299, %v358
    %v360 = vlaneseq
    %v361 = vshrl.u32 %v360, 7
    %v362 = vsub.s32 %v303, %v361
    %v363 = vrot.slane %v300, %v362
    %v364 = vlaneseq
    %v365 = vshrl.u32 %v364, 7
    %v366 = vsub.s32 %v303, %v365
    %v367 = vrot.slane %v301, %v366
    %vm368 = vcmask 1041409
    %v369 = vsel %vm368, %v311, %v307
    %vm370 = vcmask 1042434
    %v371 = vsel %vm370, %v315, %v369
    %vm372 = vcmask 1043459
    %v373 = vsel %vm372, %v319, %v371
    %vm374 = vcmask 1044484
    %v375 = vsel %vm374, %v323, %v373
    %vm376 = vcmask 1045509
    %v377 = vsel %vm376, %v327, %v375
    %vm378 = vcmask 1046534
    %v379 = vsel %vm378, %v331, %v377
    %vm380 = vcmask 1047559
    %v381 = vsel %vm380, %v335, %v379
    %v382 = vsel %vm368, %v343, %v339
    %v383 = vsel %vm370, %v347, %v382
    %v384 = vsel %vm372, %v351, %v383
    %v385 = vsel %vm374, %v355, %v384
    %v386 = vsel %vm376, %v359, %v385
    %v387 = vsel %vm378, %v363, %v386
    %v388 = vsel %vm380, %v367, %v387
    %v389 = vpack.c.b16 %v388, %v381
    %vm390 = vcmask 31744
    %v392 = vsel %vm390, %v389, 0
    %vm394 = vcmask 1041408
    %v396 = vsel %vm394, %v262, 0
    %398 = vmatprep.subr.bf16.mxu0 0
    %399 = vmatpush1.bf16.msra.mxu0 %v396
    %400 = vmatprep.subr.bf16.mxu0 0
    %401 = vmatpush1.bf16.msra.mxu0 0
    %402 = vmatprep.subr.bf16.mxu0 0
    %403 = vmatpush1.bf16.msra.mxu0 0
    %404 = vmatprep.subr.bf16.mxu0 0
    %405 = vmatpush1.bf16.msra.mxu0 0
    %406 = vmatprep.subr.bf16.mxu0 0
    %407 = vmatpush1.bf16.msra.mxu0 0
    %408 = vmatprep.subr.bf16.mxu0 0
    %409 = vmatpush1.bf16.msra.mxu0 0
    %410 = vmatprep.subr.bf16.mxu0 0
    %411 = vmatpush1.bf16.msra.mxu0 0
    %412 = vmatprep.subr.bf16.mxu0 0
    %413 = vmatpush1.bf16.msra.mxu0 0
    %414 = vmatprep.subr.bf16.mxu0 0
    %415 = vmatpush1.bf16.msra.mxu0 0
    %416 = vmatprep.subr.bf16.mxu0 0
    %417 = vmatpush1.bf16.msra.mxu0 0
    %418 = vmatprep.subr.bf16.mxu0 0
    %419 = vmatpush1.bf16.msra.mxu0 0
    %420 = vmatprep.subr.bf16.mxu0 0
    %421 = vmatpush1.bf16.msra.mxu0 0
    %422 = vmatprep.subr.bf16.mxu0 0
    %423 = vmatpush1.bf16.msra.mxu0 0
    %424 = vmatprep.subr.bf16.mxu0 0
    %425 = vmatpush1.bf16.msra.mxu0 0
    %426 = vmatprep.subr.bf16.mxu0 0
    %427 = vmatpush1.bf16.msra.mxu0 0
    %428 = vmatprep.subr.bf16.mxu0 0
    %429 = vmatpush1.bf16.msra.mxu0 0
    %430 = vmatprep.mubr.bf16.mxu0 0
    %431 = vmatmul.mubr.bf16.gmra.mrb[0].mxu0 %v392
    %v432 = vpop.f32.mrb[0].mxu0
    %v433 = vadd.f32 %v268, %v432
    %v434 = vpop.f32.mrb[0].mxu0
    %v435 = vpop.f32.mrb[0].mxu0
    %v436 = vadd.f32 %v268, %v435
    %v437 = vpop.f32.mrb[0].mxu0
    %438 = vdwg.mxu0
    %v439 = vmax.f32 %v433, 0.0
    %v440 = vmax.f32 %v436, 0.0
    %v441 = vpack.c.bf16 %v440, %v439
    %v442 = vld [vmem:[#allocation6] sm:$0xff]
    %v443 = vld [vmem:[#allocation6 + $0x8] sm:$0xff]
    %v444 = vld [vmem:[#allocation6 + $0x10] sm:$0xff]
    %v445 = vld [vmem:[#allocation6 + $0x18] sm:$0xf]
    %v446 = vld [vmem:[#allocation6 + $0x1c] sm:$0xff]
    %v447 = vld [vmem:[#allocation6 + $0x24] sm:$0xff]
    %v448 = vld [vmem:[#allocation6 + $0x2c] sm:$0xff]
    %v449 = vld [vmem:[#allocation6 + $0x34] sm:$0xf]
    %v450 = vld [vmem:[#allocation6 + $0x38] sm:$0xff]
    %v451 = vld [vmem:[#allocation6 + $0x40] sm:$0xff]
    %v452 = vld [vmem:[#allocation6 + $0x48] sm:$0xff]
    %v453 = vld [vmem:[#allocation6 + $0x50] sm:$0xf]
    %v454 = vld [vmem:[#allocation6 + $0x54] sm:$0xff]
    %v455 = vld [vmem:[#allocation6 + $0x5c] sm:$0xff]
    %v456 = vld [vmem:[#allocation6 + $0x64] sm:$0xff]
    %v457 = vld [vmem:[#allocation6 + $0x6c] sm:$0xf]
    %v458 = vld [vmem:[#allocation7] sm:$0xff]
    %v460 = vlaneseq
    %v461 = vshrl.u32 %v460, 7
    %v462 = vsub.s32 0, %v461
    %v463 = vrot.slane %v458, %v462
    %v464 = vlaneseq
    %v465 = vshrl.u32 %v464, 7
    %v466 = vsub.s32 1, %v465
    %v467 = vrot.slane %v458, %v466
    %v468 = vlaneseq
    %v469 = vshrl.u32 %v468, 7
    %v470 = vsub.s32 2, %v469
    %v471 = vrot.slane %v458, %v470
    %v472 = vlaneseq
    %v473 = vshrl.u32 %v472, 7
    %v474 = vsub.s32 3, %v473
    %v475 = vrot.slane %v458, %v474
    %v476 = vlaneseq
    %v477 = vshrl.u32 %v476, 7
    %v478 = vsub.s32 4, %v477
    %v479 = vrot.slane %v458, %v478
    %v480 = vlaneseq
    %v481 = vshrl.u32 %v480, 7
    %v482 = vsub.s32 5, %v481
    %v483 = vrot.slane %v458, %v482
    %v484 = vlaneseq
    %v485 = vshrl.u32 %v484, 7
    %v486 = vsub.s32 6, %v485
    %v487 = vrot.slane %v458, %v486
    %v511 = vunpack.c.l.b16 %v442
    %v512 = vunpack.c.h.b16 %v442
    %v513 = vunpack.c.l.b16 %v443
    %v514 = vunpack.c.h.b16 %v443
    %v515 = vunpack.c.l.b16 %v444
    %v516 = vunpack.c.h.b16 %v444
    %v517 = vunpack.c.l.b16 %v445
    %v518 = vunpack.c.l.b16 %v446
    %v519 = vunpack.c.h.b16 %v446
    %v520 = vunpack.c.l.b16 %v447
    %v521 = vunpack.c.h.b16 %v447
    %v522 = vunpack.c.l.b16 %v448
    %v523 = vunpack.c.h.b16 %v448
    %v524 = vunpack.c.l.b16 %v449
    %v525 = vunpack.c.l.b16 %v450
    %v526 = vunpack.c.h.b16 %v450
    %v527 = vunpack.c.l.b16 %v451
    %v528 = vunpack.c.h.b16 %v451
    %v529 = vunpack.c.l.b16 %v452
    %v530 = vunpack.c.h.b16 %v452
    %v531 = vunpack.c.l.b16 %v453
    %v532 = vunpack.c.l.b16 %v454
    %v533 = vunpack.c.h.b16 %v454
    %v534 = vunpack.c.l.b16 %v455
    %v535 = vunpack.c.h.b16 %v455
    %v536 = vunpack.c.l.b16 %v456
    %v537 = vunpack.c.h.b16 %v456
    %v538 = vunpack.c.l.b16 %v457
    %v539 = vpack.c.b16 %v518, %v511
    %v540 = vpack.c.b16 %v519, %v512
    %v541 = vpack.c.b16 %v520, %v513
    %v542 = vpack.c.b16 %v521, %v514
    %v543 = vpack.c.b16 %v522, %v515
    %v544 = vpack.c.b16 %v523, %v516
    %v545 = vpack.c.b16 %v524, %v517
    %v546 = vpack.c.b16 %v532, %v525
    %v547 = vpack.c.b16 %v533, %v526
    %v548 = vpack.c.b16 %v534, %v527
    %v549 = vpack.c.b16 %v535, %v528
    %v550 = vpack.c.b16 %v536, %v529
    %v551 = vpack.c.b16 %v537, %v530
    %v552 = vpack.c.b16 %v538, %v531
    %vm567 = vcmask 261120
    %v569 = vsel %vm567, %v441, 0
    %571 = vmatprep.subr.bf16.mxu0 %v540
    %572 = vmatpush1.bf16.msra.mxu0 %v539
    %573 = vmatprep.subr.bf16.mxu0 %v547
    %574 = vmatpush1.bf16.msra.mxu0 %v546
    %575 = vmatprep.subr.bf16.mxu0 0
    %576 = vmatpush1.bf16.msra.mxu0 0
    %577 = vmatprep.subr.bf16.mxu0 0
    %578 = vmatpush1.bf16.msra.mxu0 0
    %579 = vmatprep.subr.bf16.mxu0 0
    %580 = vmatpush1.bf16.msra.mxu0 0
    %581 = vmatprep.subr.bf16.mxu0 0
    %582 = vmatpush1.bf16.msra.mxu0 0
    %583 = vmatprep.subr.bf16.mxu0 0
    %584 = vmatpush1.bf16.msra.mxu0 0
    %585 = vmatprep.subr.bf16.mxu0 0
    %586 = vmatpush1.bf16.msra.mxu0 0
    %587 = vmatprep.subr.bf16.mxu0 0
    %588 = vmatpush1.bf16.msra.mxu0 0
    %589 = vmatprep.subr.bf16.mxu0 0
    %590 = vmatpush1.bf16.msra.mxu0 0
    %591 = vmatprep.subr.bf16.mxu0 0
    %592 = vmatpush1.bf16.msra.mxu0 0
    %593 = vmatprep.subr.bf16.mxu0 0
    %594 = vmatpush1.bf16.msra.mxu0 0
    %595 = vmatprep.subr.bf16.mxu0 0
    %596 = vmatpush1.bf16.msra.mxu0 0
    %597 = vmatprep.subr.bf16.mxu0 0
    %598 = vmatpush1.bf16.msra.mxu0 0
    %599 = vmatprep.subr.bf16.mxu0 0
    %600 = vmatpush1.bf16.msra.mxu0 0
    %601 = vmatprep.subr.bf16.mxu0 0
    %602 = vmatpush1.bf16.msra.mxu0 0
    %603 = vmatprep.mubr.bf16.mxu0 0
    %604 = vmatmul.mubr.bf16.gmra.mrb[0].mxu0 %v569
    %v605 = vpop.f32.mrb[0].mxu0
    %v606 = vadd.f32 %v463, %v605
    %v607 = vpop.f32.mrb[0].mxu0
    %v608 = vadd.f32 %v467, %v607
    %v609 = vpop.f32.mrb[0].mxu0
    %v610 = vadd.f32 %v463, %v609
    %v611 = vpop.f32.mrb[0].mxu0
    %v612 = vadd.f32 %v467, %v611
    %613 = vdwg.mxu0
    %614 = vmatprep.subr.bf16.mxu0 %v542
    %615 = vmatpush1.bf16.msra.mxu0 %v541
    %616 = vmatprep.subr.bf16.mxu0 %v549
    %617 = vmatpush1.bf16.msra.mxu0 %v548
    %618 = vmatprep.subr.bf16.mxu0 0
    %619 = vmatpush1.bf16.msra.mxu0 0
    %620 = vmatprep.subr.bf16.mxu0 0
    %621 = vmatpush1.bf16.msra.mxu0 0
    %622 = vmatprep.subr.bf16.mxu0 0
    %623 = vmatpush1.bf16.msra.mxu0 0
    %624 = vmatprep.subr.bf16.mxu0 0
    %625 = vmatpush1.bf16.msra.mxu0 0
    %626 = vmatprep.subr.bf16.mxu0 0
    %627 = vmatpush1.bf16.msra.mxu0 0
    %628 = vmatprep.subr.bf16.mxu0 0
    %629 = vmatpush1.bf16.msra.mxu0 0
    %630 = vmatprep.subr.bf16.mxu0 0
    %631 = vmatpush1.bf16.msra.mxu0 0
    %632 = vmatprep.subr.bf16.mxu0 0
    %633 = vmatpush1.bf16.msra.mxu0 0
    %634 = vmatprep.subr.bf16.mxu0 0
    %635 = vmatpush1.bf16.msra.mxu0 0
    %636 = vmatprep.subr.bf16.mxu0 0
    %637 = vmatpush1.bf16.msra.mxu0 0
    %638 = vmatprep.subr.bf16.mxu0 0
    %639 = vmatpush1.bf16.msra.mxu0 0
    %640 = vmatprep.subr.bf16.mxu0 0
    %641 = vmatpush1.bf16.msra.mxu0 0
    %642 = vmatprep.subr.bf16.mxu0 0
    %643 = vmatpush1.bf16.msra.mxu0 0
    %644 = vmatprep.subr.bf16.mxu0 0
    %645 = vmatpush1.bf16.msra.mxu0 0
    %646 = vmatprep.mubr.bf16.mxu0 0
    %647 = vmatmul.mubr.bf16.gmra.mrb[0].mxu0 %v569
    %v648 = vpop.f32.mrb[0].mxu0
    %v649 = vadd.f32 %v471, %v648
    %v650 = vpop.f32.mrb[0].mxu0
    %v651 = vadd.f32 %v475, %v650
    %v652 = vpop.f32.mrb[0].mxu0
    %v653 = vadd.f32 %v471, %v652
    %v654 = vpop.f32.mrb[0].mxu0
    %v655 = vadd.f32 %v475, %v654
    %656 = vdwg.mxu0
    %657 = vmatprep.subr.bf16.mxu0 %v544
    %658 = vmatpush1.bf16.msra.mxu0 %v543
    %659 = vmatprep.subr.bf16.mxu0 %v551
    %660 = vmatpush1.bf16.msra.mxu0 %v550
    %661 = vmatprep.subr.bf16.mxu0 0
    %662 = vmatpush1.bf16.msra.mxu0 0
    %663 = vmatprep.subr.bf16.mxu0 0
    %664 = vmatpush1.bf16.msra.mxu0 0
    %665 = vmatprep.subr.bf16.mxu0 0
    %666 = vmatpush1.bf16.msra.mxu0 0
    %667 = vmatprep.subr.bf16.mxu0 0
    %668 = vmatpush1.bf16.msra.mxu0 0
    %669 = vmatprep.subr.bf16.mxu0 0
    %670 = vmatpush1.bf16.msra.mxu0 0
    %671 = vmatprep.subr.bf16.mxu0 0
    %672 = vmatpush1.bf16.msra.mxu0 0
    %673 = vmatprep.subr.bf16.mxu0 0
    %674 = vmatpush1.bf16.msra.mxu0 0
    %675 = vmatprep.subr.bf16.mxu0 0
    %676 = vmatpush1.bf16.msra.mxu0 0
    %677 = vmatprep.subr.bf16.mxu0 0
    %678 = vmatpush1.bf16.msra.mxu0 0
    %679 = vmatprep.subr.bf16.mxu0 0
    %680 = vmatpush1.bf16.msra.mxu0 0
    %681 = vmatprep.subr.bf16.mxu0 0
    %682 = vmatpush1.bf16.msra.mxu0 0
    %683 = vmatprep.subr.bf16.mxu0 0
    %684 = vmatpush1.bf16.msra.mxu0 0
    %685 = vmatprep.subr.bf16.mxu0 0
    %686 = vmatpush1.bf16.msra.mxu0 0
    %687 = vmatprep.subr.bf16.mxu0 0
    %688 = vmatpush1.bf16.msra.mxu0 0
    %689 = vmatprep.mubr.bf16.mxu0 0
    %690 = vmatmul.mubr.bf16.gmra.mrb[0].mxu0 %v569
    %v691 = vpop.f32.mrb[0].mxu0
    %v692 = vadd.f32 %v479, %v691
    %v693 = vpop.f32.mrb[0].mxu0
    %v694 = vadd.f32 %v483, %v693
    %v695 = vpop.f32.mrb[0].mxu0
    %v696 = vadd.f32 %v479, %v695
    %v697 = vpop.f32.mrb[0].mxu0
    %v698 = vadd.f32 %v483, %v697
    %699 = vdwg.mxu0
    %700 = vmatprep.subr.bf16.mxu0 0
    %701 = vmatpush1.bf16.msra.mxu0 %v545
    %702 = vmatprep.subr.bf16.mxu0 0
    %703 = vmatpush1.bf16.msra.mxu0 %v552
    %704 = vmatprep.subr.bf16.mxu0 0
    %705 = vmatpush1.bf16.msra.mxu0 0
    %706 = vmatprep.subr.bf16.mxu0 0
    %707 = vmatpush1.bf16.msra.mxu0 0
    %708 = vmatprep.subr.bf16.mxu0 0
    %709 = vmatpush1.bf16.msra.mxu0 0
    %710 = vmatprep.subr.bf16.mxu0 0
    %711 = vmatpush1.bf16.msra.mxu0 0
    %712 = vmatprep.subr.bf16.mxu0 0
    %713 = vmatpush1.bf16.msra.mxu0 0
    %714 = vmatprep.subr.bf16.mxu0 0
    %715 = vmatpush1.bf16.msra.mxu0 0
    %716 = vmatprep.subr.bf16.mxu0 0
    %717 = vmatpush1.bf16.msra.mxu0 0
    %718 = vmatprep.subr.bf16.mxu0 0
    %719 = vmatpush1.bf16.msra.mxu0 0
    %720 = vmatprep.subr.bf16.mxu0 0
    %721 = vmatpush1.bf16.msra.mxu0 0
    %722 = vmatprep.subr.bf16.mxu0 0
    %723 = vmatpush1.bf16.msra.mxu0 0
    %724 = vmatprep.subr.bf16.mxu0 0
    %725 = vmatpush1.bf16.msra.mxu0 0
    %726 = vmatprep.subr.bf16.mxu0 0
    %727 = vmatpush1.bf16.msra.mxu0 0
    %728 = vmatprep.subr.bf16.mxu0 0
    %729 = vmatpush1.bf16.msra.mxu0 0
    %730 = vmatprep.subr.bf16.mxu0 0
    %731 = vmatpush1.bf16.msra.mxu0 0
    %732 = vmatprep.mubr.bf16.mxu0 0
    %733 = vmatmul.mubr.bf16.gmra.mrb[0].mxu0 %v569
    %v734 = vpop.f32.mrb[0].mxu0
    %v735 = vadd.f32 %v487, %v734
    %v736 = vpop.f32.mrb[0].mxu0
    %v737 = vpop.f32.mrb[0].mxu0
    %v738 = vadd.f32 %v487, %v737
    %v739 = vpop.f32.mrb[0].mxu0
    %740 = vdwg.mxu0
    %v741 = vmul.f32 %v606, %v606
    %v742 = vmul.f32 %v610, %v610
    %v743 = vmul.f32 %v608, %v608
    %v744 = vmul.f32 %v612, %v612
    %v745 = vadd.f32 %v741, %v743
    %v746 = vadd.f32 %v742, %v744
    %v747 = vmul.f32 %v649, %v649
    %v748 = vmul.f32 %v653, %v653
    %v749 = vadd.f32 %v745, %v747
    %v750 = vadd.f32 %v746, %v748
    %v751 = vadd.f32 %v749, 1e-08
    %v752 = vadd.f32 %v750, 1e-08
    %v753 = vrsqrt.pop %v751
    %v754 = vrsqrt.pop %v752
    %v755 = vmul.f32 %v606, %v753
    %v756 = vmul.f32 %v610, %v754
    %v757 = vmul.f32 %v608, %v753
    %v758 = vmul.f32 %v612, %v754
    %v759 = vmul.f32 %v649, %v753
    %v760 = vmul.f32 %v653, %v754
    %v761 = vmul.f32 %v755, %v651
    %v762 = vmul.f32 %v756, %v655
    %v763 = vmul.f32 %v757, %v692
    %v764 = vmul.f32 %v758, %v696
    %v765 = vadd.f32 %v761, %v763
    %v766 = vadd.f32 %v762, %v764
    %v767 = vmul.f32 %v759, %v694
    %v768 = vmul.f32 %v760, %v698
    %v769 = vadd.f32 %v765, %v767
    %v770 = vadd.f32 %v766, %v768
    %v771 = vmul.f32 %v769, %v755
    %v772 = vmul.f32 %v770, %v756
    %v773 = vsub.f32 %v651, %v771
    %v774 = vsub.f32 %v655, %v772
    %v775 = vmul.f32 %v769, %v757
    %v776 = vmul.f32 %v770, %v758
    %v777 = vsub.f32 %v692, %v775
    %v778 = vsub.f32 %v696, %v776
    %v779 = vmul.f32 %v769, %v759
    %v780 = vmul.f32 %v770, %v760
    %v781 = vsub.f32 %v694, %v779
    %v782 = vsub.f32 %v698, %v780
    %v783 = vmul.f32 %v773, %v773
    %v784 = vmul.f32 %v774, %v774
    %v785 = vmul.f32 %v777, %v777
    %v786 = vmul.f32 %v778, %v778
    %v787 = vadd.f32 %v783, %v785
    %v788 = vadd.f32 %v784, %v786
    %v789 = vmul.f32 %v781, %v781
    %v790 = vmul.f32 %v782, %v782
    %v791 = vadd.f32 %v787, %v789
    %v792 = vadd.f32 %v788, %v790
    %v793 = vadd.f32 %v791, 1e-08
    %v794 = vadd.f32 %v792, 1e-08
    %v795 = vrsqrt.pop %v793
    %v796 = vrsqrt.pop %v794
    %v797 = vmul.f32 %v773, %v795
    %v798 = vmul.f32 %v774, %v796
    %v799 = vmul.f32 %v777, %v795
    %v800 = vmul.f32 %v778, %v796
    %v801 = vmul.f32 %v781, %v795
    %v802 = vmul.f32 %v782, %v796
    %v803 = vmul.f32 %v757, %v801
    %v804 = vmul.f32 %v758, %v802
    %v805 = vmul.f32 %v759, %v799
    %v806 = vmul.f32 %v760, %v800
    %v807 = vsub.f32 %v803, %v805
    %v808 = vsub.f32 %v804, %v806
    %v809 = vmul.f32 %v759, %v797
    %v810 = vmul.f32 %v760, %v798
    %v811 = vmul.f32 %v755, %v801
    %v812 = vmul.f32 %v756, %v802
    %v813 = vsub.f32 %v809, %v811
    %v814 = vsub.f32 %v810, %v812
    %v815 = vmul.f32 %v755, %v799
    %v816 = vmul.f32 %v756, %v800
    %v817 = vmul.f32 %v757, %v797
    %v818 = vmul.f32 %v758, %v798
    %v819 = vsub.f32 %v815, %v817
    %v820 = vsub.f32 %v816, %v818
    %v821 = vpack.c.bf16 %v738, %v735
    %v822 = vpack.c.bf16 %v756, %v755
    %v823 = vpack.c.bf16 %v798, %v797
    %v824 = vpack.c.bf16 %v808, %v807
    %v825 = vpack.c.bf16 %v758, %v757
    %v826 = vpack.c.bf16 %v800, %v799
    %v827 = vpack.c.bf16 %v814, %v813
    %v828 = vpack.c.bf16 %v760, %v759
    %v829 = vpack.c.bf16 %v802, %v801
    %v830 = vpack.c.bf16 %v820, %v819
    %v831 = vld [vmem:[#allocation9] sm:$0xff]
    %v832 = vld [vmem:[#allocation9 + $0x8] sm:$0xff]
    %v833 = vld [vmem:[#allocation9 + $0x10] sm:$0xff]
    %v834 = vld [vmem:[#allocation9 + $0x18] sm:$0xff]
    %v835 = vld [vmem:[#allocation9 + $0x20] sm:$0xff]
    %v836 = vld [vmem:[#allocation9 + $0x28] sm:$0xff]
    %v837 = vld [vmem:[#allocation9 + $0x30] sm:$0xff]
    %v838 = vld [vmem:[#allocation9 + $0x38] sm:$0xff]
    %v839 = vld [vmem:[#allocation9 + $0x40] sm:$0xff]
    %v840 = vld [vmem:[#allocation9 + $0x48] sm:$0xff]
    %v841 = vld [vmem:[#allocation9 + $0x50] sm:$0xff]
    %v842 = vld [vmem:[#allocation9 + $0x58] sm:$0xff]
    %v843 = vld [vmem:[#allocation9 + $0x60] sm:$0xff]
    %v844 = vld [vmem:[#allocation9 + $0x68] sm:$0xff]
    %v845 = vld [vmem:[#allocation9 + $0x70] sm:$0xff]
    %v846 = vld [vmem:[#allocation9 + $0x78] sm:$0xff]
    %v847 = vld [vmem:[#allocation9 + $0x80] sm:$0xff]
    %v848 = vld [vmem:[#allocation9 + $0x88] sm:$0xff]
    %v849 = vld [vmem:[#allocation9 + $0x90] sm:$0xff]
    %v850 = vld [vmem:[#allocation9 + $0x98] sm:$0xff]
    %v851 = vld [vmem:[#allocation9 + $0xa0] sm:$0xff]
    %v852 = vld [vmem:[#allocation9 + $0xa8] sm:$0xff]
    %v853 = vld [vmem:[#allocation9 + $0xb0] sm:$0xff]
    %v854 = vld [vmem:[#allocation9 + $0xb8] sm:$0xff]
    %v855 = vld [vmem:[#allocation9 + $0xc0] sm:$0xff]
    %v856 = vld [vmem:[#allocation9 + $0xc8] sm:$0xff]
    %v857 = vld [vmem:[#allocation9 + $0xd0] sm:$0xff]
    %v858 = vld [vmem:[#allocation9 + $0xd8] sm:$0xff]
    %v859 = vld [vmem:[#allocation9 + $0xe0] sm:$0xff]
    %v860 = vld [vmem:[#allocation9 + $0xe8] sm:$0xff]
    %v861 = vld [vmem:[#allocation9 + $0xf0] sm:$0xff]
    %v862 = vld [vmem:[#allocation9 + $0xf8] sm:$0xff]
    %v863 = vld [vmem:[#allocation9 + $0x100] sm:$0xff]
    %v864 = vld [vmem:[#allocation9 + $0x108] sm:$0xff]
    %v865 = vld [vmem:[#allocation9 + $0x110] sm:$0xff]
    %v866 = vld [vmem:[#allocation9 + $0x118] sm:$0xff]
    %v867 = vld [vmem:[#allocation9 + $0x120] sm:$0xff]
    %v868 = vld [vmem:[#allocation9 + $0x128] sm:$0xff]
    %v869 = vld [vmem:[#allocation9 + $0x130] sm:$0xff]
    %v870 = vld [vmem:[#allocation9 + $0x138] sm:$0xff]
    %v871 = vld [vmem:[#allocation9 + $0x140] sm:$0xff]
    %v872 = vld [vmem:[#allocation9 + $0x148] sm:$0xff]
    %v873 = vld [vmem:[#allocation9 + $0x150] sm:$0xff]
    %v874 = vld [vmem:[#allocation9 + $0x158] sm:$0xff]
    %v875 = vld [vmem:[#allocation9 + $0x160] sm:$0xff]
    %v876 = vld [vmem:[#allocation9 + $0x168] sm:$0xff]
    %v877 = vld [vmem:[#allocation9 + $0x170] sm:$0xff]
    %v878 = vld [vmem:[#allocation9 + $0x178] sm:$0xff]
    %v879 = vld [vmem:[#allocation9 + $0x180] sm:$0xff]
    %v880 = vld [vmem:[#allocation9 + $0x188] sm:$0xff]
    %v881 = vld [vmem:[#allocation9 + $0x190] sm:$0xff]
    %v882 = vld [vmem:[#allocation9 + $0x198] sm:$0xff]
    %v883 = vld [vmem:[#allocation9 + $0x1a0] sm:$0xff]
    %v884 = vld [vmem:[#allocation9 + $0x1a8] sm:$0xff]
    %v885 = vld [vmem:[#allocation9 + $0x1b0] sm:$0xff]
    %v886 = vld [vmem:[#allocation9 + $0x1b8] sm:$0xff]
    %v887 = vld [vmem:[#allocation9 + $0x1c0] sm:$0xff]
    %v888 = vld [vmem:[#allocation9 + $0x1c8] sm:$0xff]
    %v889 = vld [vmem:[#allocation9 + $0x1d0] sm:$0xff]
    %v890 = vld [vmem:[#allocation9 + $0x1d8] sm:$0xff]
    %v891 = vld [vmem:[#allocation9 + $0x1e0] sm:$0xff]
    %v892 = vld [vmem:[#allocation9 + $0x1e8] sm:$0xff]
    %v893 = vld [vmem:[#allocation9 + $0x1f0] sm:$0xff]
    %v894 = vld [vmem:[#allocation9 + $0x1f8] sm:$0xff]
    %v895 = vld [vmem:[#allocation9 + $0x200] sm:$0xff]
    %v896 = vld [vmem:[#allocation9 + $0x208] sm:$0xff]
    %v897 = vld [vmem:[#allocation9 + $0x210] sm:$0xff]
    %v898 = vld [vmem:[#allocation9 + $0x218] sm:$0xff]
    %v899 = vld [vmem:[#allocation9 + $0x220] sm:$0xff]
    %v900 = vld [vmem:[#allocation9 + $0x228] sm:$0xff]
    %v901 = vld [vmem:[#allocation9 + $0x230] sm:$0xff]
    %v902 = vld [vmem:[#allocation9 + $0x238] sm:$0xff]
    %v903 = vld [vmem:[#allocation9 + $0x240] sm:$0xff]
    %v904 = vld [vmem:[#allocation9 + $0x248] sm:$0xff]
    %v905 = vld [vmem:[#allocation9 + $0x250] sm:$0xff]
    %v906 = vld [vmem:[#allocation9 + $0x258] sm:$0xff]
    %v907 = vld [vmem:[#allocation9 + $0x260] sm:$0xff]
    %v908 = vld [vmem:[#allocation9 + $0x268] sm:$0xff]
    %v909 = vld [vmem:[#allocation9 + $0x270] sm:$0xff]
    %v910 = vld [vmem:[#allocation9 + $0x278] sm:$0xff]
    %v911 = vld [vmem:[#allocation9 + $0x280] sm:$0xff]
    %v912 = vld [vmem:[#allocation9 + $0x288] sm:$0xff]
    %v913 = vld [vmem:[#allocation9 + $0x290] sm:$0xff]
    %v914 = vld [vmem:[#allocation9 + $0x298] sm:$0xff]
    %v915 = vld [vmem:[#allocation9 + $0x2a0] sm:$0xff]
    %v916 = vld [vmem:[#allocation9 + $0x2a8] sm:$0xff]
    %v917 = vld [vmem:[#allocation9 + $0x2b0] sm:$0xff]
    %v918 = vld [vmem:[#allocation9 + $0x2b8] sm:$0xff]
    %v919 = vld [vmem:[#allocation9 + $0x2c0] sm:$0xff]
    %v920 = vld [vmem:[#allocation9 + $0x2c8] sm:$0xff]
    %v921 = vld [vmem:[#allocation9 + $0x2d0] sm:$0xff]
    %v922 = vld [vmem:[#allocation9 + $0x2d8] sm:$0xff]
    %v923 = vld [vmem:[#allocation9 + $0x2e0] sm:$0xff]
    %v924 = vld [vmem:[#allocation9 + $0x2e8] sm:$0xff]
    %v925 = vld [vmem:[#allocation9 + $0x2f0] sm:$0xff]
    %v926 = vld [vmem:[#allocation9 + $0x2f8] sm:$0xff]
    %v927 = vld [vmem:[#allocation9 + $0x300] sm:$0xff]
    %v928 = vld [vmem:[#allocation9 + $0x308] sm:$0xff]
    %v929 = vld [vmem:[#allocation9 + $0x310] sm:$0xff]
    %v930 = vld [vmem:[#allocation9 + $0x318] sm:$0xff]
    %v931 = vld [vmem:[#allocation9 + $0x320] sm:$0xff]
    %v932 = vld [vmem:[#allocation9 + $0x328] sm:$0xff]
    %v933 = vld [vmem:[#allocation9 + $0x330] sm:$0xff]
    %v934 = vld [vmem:[#allocation9 + $0x338] sm:$0xff]
    %v935 = vld [vmem:[#allocation9 + $0x340] sm:$0xff]
    %v936 = vld [vmem:[#allocation9 + $0x348] sm:$0xff]
    %v937 = vld [vmem:[#allocation9 + $0x350] sm:$0xff]
    %v938 = vld [vmem:[#allocation9 + $0x358] sm:$0xff]
    %v939 = vld [vmem:[#allocation9 + $0x360] sm:$0xff]
    %v940 = vld [vmem:[#allocation9 + $0x368] sm:$0xff]
    %v941 = vld [vmem:[#allocation9 + $0x370] sm:$0xff]
    %v942 = vld [vmem:[#allocation9 + $0x378] sm:$0xff]
    %v943 = vld [vmem:[#allocation9 + $0x380] sm:$0xff]
    %v944 = vld [vmem:[#allocation9 + $0x388] sm:$0xff]
    %v945 = vld [vmem:[#allocation9 + $0x390] sm:$0xff]
    %v946 = vld [vmem:[#allocation9 + $0x398] sm:$0xff]
    %v947 = vld [vmem:[#allocation9 + $0x3a0] sm:$0xff]
    %v948 = vld [vmem:[#allocation9 + $0x3a8] sm:$0xff]
    %v949 = vld [vmem:[#allocation9 + $0x3b0] sm:$0xff]
    %v950 = vld [vmem:[#allocation9 + $0x3b8] sm:$0xff]
    %v951 = vld [vmem:[#allocation9 + $0x3c0] sm:$0xff]
    %v952 = vld [vmem:[#allocation9 + $0x3c8] sm:$0xff]
    %v953 = vld [vmem:[#allocation9 + $0x3d0] sm:$0xff]
    %v954 = vld [vmem:[#allocation9 + $0x3d8] sm:$0xff]
    %v955 = vld [vmem:[#allocation9 + $0x3e0] sm:$0xff]
    %v956 = vld [vmem:[#allocation9 + $0x3e8] sm:$0xff]
    %v957 = vld [vmem:[#allocation9 + $0x3f0] sm:$0xff]
    %v958 = vld [vmem:[#allocation9 + $0x3f8] sm:$0xff]
    %v959 = vld [vmem:[#allocation9 + $0x400] sm:$0xff]
    %v960 = vld [vmem:[#allocation9 + $0x408] sm:$0xff]
    %v961 = vld [vmem:[#allocation9 + $0x410] sm:$0xff]
    %v962 = vld [vmem:[#allocation9 + $0x418] sm:$0xff]
    %v963 = vld [vmem:[#allocation9 + $0x420] sm:$0xff]
    %v964 = vld [vmem:[#allocation9 + $0x428] sm:$0xff]
    %v965 = vld [vmem:[#allocation9 + $0x430] sm:$0xff]
    %v966 = vld [vmem:[#allocation9 + $0x438] sm:$0xff]
    %v967 = vld [vmem:[#allocation9 + $0x440] sm:$0xff]
    %v968 = vld [vmem:[#allocation9 + $0x448] sm:$0xff]
    %v969 = vld [vmem:[#allocation9 + $0x450] sm:$0xff]
    %v970 = vld [vmem:[#allocation9 + $0x458] sm:$0xff]
    %v971 = vld [vmem:[#allocation9 + $0x460] sm:$0xff]
    %v972 = vld [vmem:[#allocation9 + $0x468] sm:$0xff]
    %v973 = vld [vmem:[#allocation9 + $0x470] sm:$0xff]
    %v974 = vld [vmem:[#allocation9 + $0x478] sm:$0xff]
    %v975 = vld [vmem:[#allocation9 + $0x480] sm:$0xff]
    %v976 = vld [vmem:[#allocation9 + $0x488] sm:$0xff]
    %v977 = vld [vmem:[#allocation9 + $0x490] sm:$0xff]
    %v978 = vld [vmem:[#allocation9 + $0x498] sm:$0xff]
    %v979 = vld [vmem:[#allocation9 + $0x4a0] sm:$0xff]
    %v980 = vld [vmem:[#allocation9 + $0x4a8] sm:$0xff]
    %v981 = vld [vmem:[#allocation9 + $0x4b0] sm:$0xff]
    %v982 = vld [vmem:[#allocation9 + $0x4b8] sm:$0xff]
    %v983 = vld [vmem:[#allocation9 + $0x4c0] sm:$0xff]
    %v984 = vld [vmem:[#allocation9 + $0x4c8] sm:$0xff]
    %v985 = vld [vmem:[#allocation9 + $0x4d0] sm:$0xff]
    %v986 = vld [vmem:[#allocation9 + $0x4d8] sm:$0xff]
    %v987 = vld [vmem:[#allocation9 + $0x4e0] sm:$0xff]
    %v988 = vld [vmem:[#allocation9 + $0x4e8] sm:$0xff]
    %v989 = vld [vmem:[#allocation9 + $0x4f0] sm:$0xff]
    %v990 = vld [vmem:[#allocation9 + $0x4f8] sm:$0xff]
    %v991 = vld [vmem:[#allocation9 + $0x500] sm:$0xff]
    %v992 = vld [vmem:[#allocation9 + $0x508] sm:$0xff]
    %v993 = vld [vmem:[#allocation9 + $0x510] sm:$0xff]
    %v994 = vld [vmem:[#allocation9 + $0x518] sm:$0xff]
    %v995 = vld [vmem:[#allocation9 + $0x520] sm:$0xff]
    %v996 = vld [vmem:[#allocation9 + $0x528] sm:$0xff]
    %v997 = vld [vmem:[#allocation9 + $0x530] sm:$0xff]
    %v998 = vld [vmem:[#allocation9 + $0x538] sm:$0xff]
    %v999 = vld [vmem:[#allocation9 + $0x540] sm:$0xff]
    %v1000 = vld [vmem:[#allocation9 + $0x548] sm:$0xff]
    %v1001 = vld [vmem:[#allocation9 + $0x550] sm:$0xff]
    %v1002 = vld [vmem:[#allocation9 + $0x558] sm:$0xff]
    %v1003 = vld [vmem:[#allocation9 + $0x560] sm:$0xff]
    %v1004 = vld [vmem:[#allocation9 + $0x568] sm:$0xff]
    %v1005 = vld [vmem:[#allocation9 + $0x570] sm:$0xff]
    %v1006 = vld [vmem:[#allocation9 + $0x578] sm:$0xff]
    %v1007 = vld [vmem:[#allocation9 + $0x580] sm:$0xff]
    %v1008 = vld [vmem:[#allocation9 + $0x588] sm:$0xff]
    %v1009 = vld [vmem:[#allocation9 + $0x590] sm:$0xff]
    %v1010 = vld [vmem:[#allocation9 + $0x598] sm:$0xff]
    %v1011 = vld [vmem:[#allocation9 + $0x5a0] sm:$0xff]
    %v1012 = vld [vmem:[#allocation9 + $0x5a8] sm:$0xff]
    %v1013 = vld [vmem:[#allocation9 + $0x5b0] sm:$0xff]
    %v1014 = vld [vmem:[#allocation9 + $0x5b8] sm:$0xff]
    %v1015 = vld [vmem:[#allocation9 + $0x5c0] sm:$0xff]
    %v1016 = vld [vmem:[#allocation9 + $0x5c8] sm:$0xff]
    %v1017 = vld [vmem:[#allocation9 + $0x5d0] sm:$0xff]
    %v1018 = vld [vmem:[#allocation9 + $0x5d8] sm:$0xff]
    %v1019 = vld [vmem:[#allocation9 + $0x5e0] sm:$0xff]
    %v1020 = vld [vmem:[#allocation9 + $0x5e8] sm:$0xff]
    %v1021 = vld [vmem:[#allocation9 + $0x5f0] sm:$0xff]
    %v1022 = vld [vmem:[#allocation9 + $0x5f8] sm:$0xff]
    %v1023 = vld [vmem:[#allocation9 + $0x600] sm:$0xff]
    %v1024 = vld [vmem:[#allocation9 + $0x608] sm:$0xff]
    %v1025 = vld [vmem:[#allocation9 + $0x610] sm:$0xff]
    %v1026 = vld [vmem:[#allocation9 + $0x618] sm:$0xff]
    %v1027 = vld [vmem:[#allocation9 + $0x620] sm:$0xff]
    %v1028 = vld [vmem:[#allocation9 + $0x628] sm:$0xff]
    %v1029 = vld [vmem:[#allocation9 + $0x630] sm:$0xff]
    %v1030 = vld [vmem:[#allocation9 + $0x638] sm:$0xff]
    %v1031 = vld [vmem:[#allocation9 + $0x640] sm:$0xff]
    %v1032 = vld [vmem:[#allocation9 + $0x648] sm:$0xff]
    %v1033 = vld [vmem:[#allocation9 + $0x650] sm:$0xff]
    %v1034 = vld [vmem:[#allocation9 + $0x658] sm:$0xff]
    %v1035 = vld [vmem:[#allocation9 + $0x660] sm:$0xff]
    %v1036 = vld [vmem:[#allocation9 + $0x668] sm:$0xff]
    %v1037 = vld [vmem:[#allocation9 + $0x670] sm:$0xff]
    %v1038 = vld [vmem:[#allocation9 + $0x678] sm:$0xff]
    %v1039 = vld [vmem:[#allocation9 + $0x680] sm:$0xff]
    %v1040 = vld [vmem:[#allocation9 + $0x688] sm:$0xff]
    %v1041 = vld [vmem:[#allocation9 + $0x690] sm:$0xff]
    %v1042 = vld [vmem:[#allocation9 + $0x698] sm:$0xff]
    %v1043 = vld [vmem:[#allocation9 + $0x6a0] sm:$0xff]
    %v1044 = vld [vmem:[#allocation9 + $0x6a8] sm:$0xff]
    %v1045 = vld [vmem:[#allocation9 + $0x6b0] sm:$0xff]
    %v1046 = vld [vmem:[#allocation9 + $0x6b8] sm:$0xff]
    %v1047 = vld [vmem:[#allocation9 + $0x6c0] sm:$0xff]
    %v1048 = vld [vmem:[#allocation9 + $0x6c8] sm:$0xff]
    %v1049 = vld [vmem:[#allocation9 + $0x6d0] sm:$0xff]
    %v1050 = vld [vmem:[#allocation9 + $0x6d8] sm:$0xff]
    %v1051 = vld [vmem:[#allocation9 + $0x6e0] sm:$0xff]
    %v1052 = vld [vmem:[#allocation9 + $0x6e8] sm:$0xff]
    %v1053 = vld [vmem:[#allocation9 + $0x6f0] sm:$0xff]
    %v1054 = vld [vmem:[#allocation9 + $0x6f8] sm:$0xff]
    %v1055 = vld [vmem:[#allocation9 + $0x700] sm:$0xff]
    %v1056 = vld [vmem:[#allocation9 + $0x708] sm:$0xff]
    %v1057 = vld [vmem:[#allocation9 + $0x710] sm:$0xff]
    %v1058 = vld [vmem:[#allocation9 + $0x718] sm:$0xff]
    %v1059 = vld [vmem:[#allocation9 + $0x720] sm:$0xff]
    %v1060 = vld [vmem:[#allocation9 + $0x728] sm:$0xff]
    %v1061 = vld [vmem:[#allocation9 + $0x730] sm:$0xff]
    %v1062 = vld [vmem:[#allocation9 + $0x738] sm:$0xff]
    %v1063 = vld [vmem:[#allocation9 + $0x740] sm:$0xff]
    %v1064 = vld [vmem:[#allocation9 + $0x748] sm:$0xff]
    %v1065 = vld [vmem:[#allocation9 + $0x750] sm:$0xff]
    %v1066 = vld [vmem:[#allocation9 + $0x758] sm:$0xff]
    %v1067 = vld [vmem:[#allocation9 + $0x760] sm:$0xff]
    %v1068 = vld [vmem:[#allocation9 + $0x768] sm:$0xff]
    %v1069 = vld [vmem:[#allocation9 + $0x770] sm:$0xff]
    %v1070 = vld [vmem:[#allocation9 + $0x778] sm:$0xff]
    %v1071 = vld [vmem:[#allocation9 + $0x780] sm:$0xff]
    %v1072 = vld [vmem:[#allocation9 + $0x788] sm:$0xff]
    %v1073 = vld [vmem:[#allocation9 + $0x790] sm:$0xff]
    %v1074 = vld [vmem:[#allocation9 + $0x798] sm:$0xff]
    %v1075 = vld [vmem:[#allocation9 + $0x7a0] sm:$0xff]
    %v1076 = vld [vmem:[#allocation9 + $0x7a8] sm:$0xff]
    %v1077 = vld [vmem:[#allocation9 + $0x7b0] sm:$0xff]
    %v1078 = vld [vmem:[#allocation9 + $0x7b8] sm:$0xff]
    %v1079 = vld [vmem:[#allocation9 + $0x7c0] sm:$0xff]
    %v1080 = vld [vmem:[#allocation9 + $0x7c8] sm:$0xff]
    %v1081 = vld [vmem:[#allocation9 + $0x7d0] sm:$0xff]
    %v1082 = vld [vmem:[#allocation9 + $0x7d8] sm:$0xff]
    %v1083 = vld [vmem:[#allocation9 + $0x7e0] sm:$0xff]
    %v1084 = vld [vmem:[#allocation9 + $0x7e8] sm:$0xff]
    %v1085 = vld [vmem:[#allocation9 + $0x7f0] sm:$0xff]
    %v1086 = vld [vmem:[#allocation9 + $0x7f8] sm:$0xff]
    %v1087 = vld [vmem:[#allocation9 + $0x800] sm:$0xff]
    %v1088 = vld [vmem:[#allocation9 + $0x808] sm:$0xff]
    %v1089 = vld [vmem:[#allocation9 + $0x810] sm:$0xff]
    %v1090 = vld [vmem:[#allocation9 + $0x818] sm:$0xff]
    %v1091 = vld [vmem:[#allocation9 + $0x820] sm:$0xff]
    %v1092 = vld [vmem:[#allocation9 + $0x828] sm:$0xff]
    %v1093 = vld [vmem:[#allocation9 + $0x830] sm:$0xff]
    %v1094 = vld [vmem:[#allocation9 + $0x838] sm:$0xff]
    %v1095 = vld [vmem:[#allocation9 + $0x840] sm:$0xff]
    %v1096 = vld [vmem:[#allocation9 + $0x848] sm:$0xff]
    %v1097 = vld [vmem:[#allocation9 + $0x850] sm:$0xff]
    %v1098 = vld [vmem:[#allocation9 + $0x858] sm:$0xff]
    %v1099 = vld [vmem:[#allocation9 + $0x860] sm:$0xff]
    %v1100 = vld [vmem:[#allocation9 + $0x868] sm:$0xff]
    %v1101 = vld [vmem:[#allocation9 + $0x870] sm:$0xff]
    %v1102 = vld [vmem:[#allocation9 + $0x878] sm:$0xff]
    %v1103 = vld [vmem:[#allocation9 + $0x880] sm:$0xff]
    %v1104 = vld [vmem:[#allocation9 + $0x888] sm:$0xff]
    %v1105 = vld [vmem:[#allocation9 + $0x890] sm:$0xff]
    %v1106 = vld [vmem:[#allocation9 + $0x898] sm:$0xff]
    %v1107 = vld [vmem:[#allocation9 + $0x8a0] sm:$0xff]
    %v1108 = vld [vmem:[#allocation9 + $0x8a8] sm:$0xff]
    %v1109 = vld [vmem:[#allocation9 + $0x8b0] sm:$0xff]
    %v1110 = vld [vmem:[#allocation9 + $0x8b8] sm:$0xff]
    %v1111 = vld [vmem:[#allocation9 + $0x8c0] sm:$0xff]
    %v1112 = vld [vmem:[#allocation9 + $0x8c8] sm:$0xff]
    %v1113 = vld [vmem:[#allocation9 + $0x8d0] sm:$0xff]
    %v1114 = vld [vmem:[#allocation9 + $0x8d8] sm:$0xff]
    %v1115 = vld [vmem:[#allocation9 + $0x8e0] sm:$0xff]
    %v1116 = vld [vmem:[#allocation9 + $0x8e8] sm:$0xff]
    %v1117 = vld [vmem:[#allocation9 + $0x8f0] sm:$0xff]
    %v1118 = vld [vmem:[#allocation9 + $0x8f8] sm:$0xff]
    %v1119 = vld [vmem:[#allocation9 + $0x900] sm:$0xff]
    %v1120 = vld [vmem:[#allocation9 + $0x908] sm:$0xff]
    %v1121 = vld [vmem:[#allocation9 + $0x910] sm:$0xff]
    %v1122 = vld [vmem:[#allocation9 + $0x918] sm:$0xff]
    %v1123 = vld [vmem:[#allocation9 + $0x920] sm:$0xff]
    %v1124 = vld [vmem:[#allocation9 + $0x928] sm:$0xff]
    %v1125 = vld [vmem:[#allocation9 + $0x930] sm:$0xff]
    %v1126 = vld [vmem:[#allocation9 + $0x938] sm:$0xff]
    %v1127 = vld [vmem:[#allocation9 + $0x940] sm:$0xff]
    %v1128 = vld [vmem:[#allocation9 + $0x948] sm:$0xff]
    %v1129 = vld [vmem:[#allocation9 + $0x950] sm:$0xff]
    %v1130 = vld [vmem:[#allocation9 + $0x958] sm:$0xff]
    %v1131 = vld [vmem:[#allocation9 + $0x960] sm:$0xff]
    %v1132 = vld [vmem:[#allocation9 + $0x968] sm:$0xff]
    %v1133 = vld [vmem:[#allocation9 + $0x970] sm:$0xff]
    %v1134 = vld [vmem:[#allocation9 + $0x978] sm:$0xff]
    %v1135 = vld [vmem:[#allocation9 + $0x980] sm:$0xff]
    %v1136 = vld [vmem:[#allocation9 + $0x988] sm:$0xff]
    %v1137 = vld [vmem:[#allocation9 + $0x990] sm:$0xff]
    %v1138 = vld [vmem:[#allocation9 + $0x998] sm:$0xff]
    %v1139 = vld [vmem:[#allocation9 + $0x9a0] sm:$0xff]
    %v1140 = vld [vmem:[#allocation9 + $0x9a8] sm:$0xff]
    %v1141 = vld [vmem:[#allocation9 + $0x9b0] sm:$0xff]
    %v1142 = vld [vmem:[#allocation9 + $0x9b8] sm:$0xff]
    %v1143 = vld [vmem:[#allocation9 + $0x9c0] sm:$0xff]
    %v1144 = vld [vmem:[#allocation9 + $0x9c8] sm:$0xff]
    %v1145 = vld [vmem:[#allocation9 + $0x9d0] sm:$0xff]
    %v1146 = vld [vmem:[#allocation9 + $0x9d8] sm:$0xff]
    %v1147 = vld [vmem:[#allocation9 + $0x9e0] sm:$0xff]
    %v1148 = vld [vmem:[#allocation9 + $0x9e8] sm:$0xff]
    %v1149 = vld [vmem:[#allocation9 + $0x9f0] sm:$0xff]
    %v1150 = vld [vmem:[#allocation9 + $0x9f8] sm:$0xff]
    %v1151 = vld [vmem:[#allocation10] sm:$0xf]
    %v1153 = vlaneseq
    %v1154 = vshrl.u32 %v1153, 7
    %v1155 = vsub.s32 0, %v1154
    %v1156 = vrot.slane %v1151, %v1155
    %v1157 = vlaneseq
    %v1158 = vshrl.u32 %v1157, 7
    %v1159 = vsub.s32 1, %v1158
    %v1160 = vrot.slane %v1151, %v1159
    %v1161 = vlaneseq
    %v1162 = vshrl.u32 %v1161, 7
    %v1163 = vsub.s32 2, %v1162
    %v1164 = vrot.slane %v1151, %v1163
    %v1165 = vlaneseq
    %v1166 = vshrl.u32 %v1165, 7
    %v1167 = vsub.s32 3, %v1166
    %v1168 = vrot.slane %v1151, %v1167
    %v1493 = vunpack.c.l.b16 %v831
    %v1494 = vunpack.c.h.b16 %v831
    %v1495 = vunpack.c.l.b16 %v832
    %v1496 = vunpack.c.h.b16 %v832
    %v1497 = vunpack.c.l.b16 %v833
    %v1498 = vunpack.c.h.b16 %v833
    %v1499 = vunpack.c.l.b16 %v834
    %v1500 = vunpack.c.h.b16 %v834
    %v1501 = vunpack.c.l.b16 %v835
    %v1502 = vunpack.c.h.b16 %v835
    %v1503 = vunpack.c.l.b16 %v836
    %v1504 = vunpack.c.h.b16 %v836
    %v1505 = vunpack.c.l.b16 %v837
    %v1506 = vunpack.c.h.b16 %v837
    %v1507 = vunpack.c.l.b16 %v838
    %v1508 = vunpack.c.h.b16 %v838
    %v1509 = vunpack.c.l.b16 %v839
    %v1510 = vunpack.c.h.b16 %v839
    %v1511 = vunpack.c.l.b16 %v840
    %v1512 = vunpack.c.h.b16 %v840
    %v1513 = vunpack.c.l.b16 %v841
    %v1514 = vunpack.c.h.b16 %v841
    %v1515 = vunpack.c.l.b16 %v842
    %v1516 = vunpack.c.h.b16 %v842
    %v1517 = vunpack.c.l.b16 %v843
    %v1518 = vunpack.c.h.b16 %v843
    %v1519 = vunpack.c.l.b16 %v844
    %v1520 = vunpack.c.h.b16 %v844
    %v1521 = vunpack.c.l.b16 %v845
    %v1522 = vunpack.c.h.b16 %v845
    %v1523 = vunpack.c.l.b16 %v846
    %v1524 = vunpack.c.h.b16 %v846
    %v1525 = vunpack.c.l.b16 %v847
    %v1526 = vunpack.c.h.b16 %v847
    %v1527 = vunpack.c.l.b16 %v848
    %v1528 = vunpack.c.h.b16 %v848
    %v1529 = vunpack.c.l.b16 %v849
    %v1530 = vunpack.c.h.b16 %v849
    %v1531 = vunpack.c.l.b16 %v850
    %v1532 = vunpack.c.h.b16 %v850
    %v1533 = vunpack.c.l.b16 %v851
    %v1534 = vunpack.c.h.b16 %v851
    %v1535 = vunpack.c.l.b16 %v852
    %v1536 = vunpack.c.h.b16 %v852
    %v1537 = vunpack.c.l.b16 %v853
    %v1538 = vunpack.c.h.b16 %v853
    %v1539 = vunpack.c.l.b16 %v854
    %v1540 = vunpack.c.h.b16 %v854
    %v1541 = vunpack.c.l.b16 %v855
    %v1542 = vunpack.c.h.b16 %v855
    %v1543 = vunpack.c.l.b16 %v856
    %v1544 = vunpack.c.h.b16 %v856
    %v1545 = vunpack.c.l.b16 %v857
    %v1546 = vunpack.c.h.b16 %v857
    %v1547 = vunpack.c.l.b16 %v858
    %v1548 = vunpack.c.h.b16 %v858
    %v1549 = vunpack.c.l.b16 %v859
    %v1550 = vunpack.c.h.b16 %v859
    %v1551 = vunpack.c.l.b16 %v860
    %v1552 = vunpack.c.h.b16 %v860
    %v1553 = vunpack.c.l.b16 %v861
    %v1554 = vunpack.c.h.b16 %v861
    %v1555 = vunpack.c.l.b16 %v862
    %v1556 = vunpack.c.h.b16 %v862
    %v1557 = vunpack.c.l.b16 %v863
    %v1558 = vunpack.c.h.b16 %v863
    %v1559 = vunpack.c.l.b16 %v864
    %v1560 = vunpack.c.h.b16 %v864
    %v1561 = vunpack.c.l.b16 %v865
    %v1562 = vunpack.c.h.b16 %v865
    %v1563 = vunpack.c.l.b16 %v866
    %v1564 = vunpack.c.h.b16 %v866
    %v1565 = vunpack.c.l.b16 %v867
    %v1566 = vunpack.c.h.b16 %v867
    %v1567 = vunpack.c.l.b16 %v868
    %v1568 = vunpack.c.h.b16 %v868
    %v1569 = vunpack.c.l.b16 %v869
    %v1570 = vunpack.c.h.b16 %v869
    %v1571 = vunpack.c.l.b16 %v870
    %v1572 = vunpack.c.h.b16 %v870
    %v1573 = vunpack.c.l.b16 %v871
    %v1574 = vunpack.c.h.b16 %v871
    %v1575 = vunpack.c.l.b16 %v872
    %v1576 = vunpack.c.h.b16 %v872
    %v1577 = vunpack.c.l.b16 %v873
    %v1578 = vunpack.c.h.b16 %v873
    %v1579 = vunpack.c.l.b16 %v874
    %v1580 = vunpack.c.h.b16 %v874
    %v1581 = vunpack.c.l.b16 %v875
    %v1582 = vunpack.c.h.b16 %v875
    %v1583 = vunpack.c.l.b16 %v876
    %v1584 = vunpack.c.h.b16 %v876
    %v1585 = vunpack.c.l.b16 %v877
    %v1586 = vunpack.c.h.b16 %v877
    %v1587 = vunpack.c.l.b16 %v878
    %v1588 = vunpack.c.h.b16 %v878
    %v1589 = vunpack.c.l.b16 %v879
    %v1590 = vunpack.c.h.b16 %v879
    %v1591 = vunpack.c.l.b16 %v880
    %v1592 = vunpack.c.h.b16 %v880
    %v1593 = vunpack.c.l.b16 %v881
    %v1594 = vunpack.c.h.b16 %v881
    %v1595 = vunpack.c.l.b16 %v882
    %v1596 = vunpack.c.h.b16 %v882
    %v1597 = vunpack.c.l.b16 %v883
    %v1598 = vunpack.c.h.b16 %v883
    %v1599 = vunpack.c.l.b16 %v884
    %v1600 = vunpack.c.h.b16 %v884
    %v1601 = vunpack.c.l.b16 %v885
    %v1602 = vunpack.c.h.b16 %v885
    %v1603 = vunpack.c.l.b16 %v886
    %v1604 = vunpack.c.h.b16 %v886
    %v1605 = vunpack.c.l.b16 %v887
    %v1606 = vunpack.c.h.b16 %v887
    %v1607 = vunpack.c.l.b16 %v888
    %v1608 = vunpack.c.h.b16 %v888
    %v1609 = vunpack.c.l.b16 %v889
    %v1610 = vunpack.c.h.b16 %v889
    %v1611 = vunpack.c.l.b16 %v890
    %v1612 = vunpack.c.h.b16 %v890
    %v1613 = vunpack.c.l.b16 %v891
    %v1614 = vunpack.c.h.b16 %v891
    %v1615 = vunpack.c.l.b16 %v892
    %v1616 = vunpack.c.h.b16 %v892
    %v1617 = vunpack.c.l.b16 %v893
    %v1618 = vunpack.c.h.b16 %v893
    %v1619 = vunpack.c.l.b16 %v894
    %v1620 = vunpack.c.h.b16 %v894
    %v1621 = vunpack.c.l.b16 %v895
    %v1622 = vunpack.c.h.b16 %v895
    %v1623 = vunpack.c.l.b16 %v896
    %v1624 = vunpack.c.h.b16 %v896
    %v1625 = vunpack.c.l.b16 %v897
    %v1626 = vunpack.c.h.b16 %v897
    %v1627 = vunpack.c.l.b16 %v898
    %v1628 = vunpack.c.h.b16 %v898
    %v1629 = vunpack.c.l.b16 %v899
    %v1630 = vunpack.c.h.b16 %v899
    %v1631 = vunpack.c.l.b16 %v900
    %v1632 = vunpack.c.h.b16 %v900
    %v1633 = vunpack.c.l.b16 %v901
    %v1634 = vunpack.c.h.b16 %v901
    %v1635 = vunpack.c.l.b16 %v902
    %v1636 = vunpack.c.h.b16 %v902
    %v1637 = vunpack.c.l.b16 %v903
    %v1638 = vunpack.c.h.b16 %v903
    %v1639 = vunpack.c.l.b16 %v904
    %v1640 = vunpack.c.h.b16 %v904
    %v1641 = vunpack.c.l.b16 %v905
    %v1642 = vunpack.c.h.b16 %v905
    %v1643 = vunpack.c.l.b16 %v906
    %v1644 = vunpack.c.h.b16 %v906
    %v1645 = vunpack.c.l.b16 %v907
    %v1646 = vunpack.c.h.b16 %v907
    %v1647 = vunpack.c.l.b16 %v908
    %v1648 = vunpack.c.h.b16 %v908
    %v1649 = vunpack.c.l.b16 %v909
    %v1650 = vunpack.c.h.b16 %v909
    %v1651 = vunpack.c.l.b16 %v910
    %v1652 = vunpack.c.h.b16 %v910
    %v1653 = vunpack.c.l.b16 %v911
    %v1654 = vunpack.c.h.b16 %v911
    %v1655 = vunpack.c.l.b16 %v912
    %v1656 = vunpack.c.h.b16 %v912
    %v1657 = vunpack.c.l.b16 %v913
    %v1658 = vunpack.c.h.b16 %v913
    %v1659 = vunpack.c.l.b16 %v914
    %v1660 = vunpack.c.h.b16 %v914
    %v1661 = vunpack.c.l.b16 %v915
    %v1662 = vunpack.c.h.b16 %v915
    %v1663 = vunpack.c.l.b16 %v916
    %v1664 = vunpack.c.h.b16 %v916
    %v1665 = vunpack.c.l.b16 %v917
    %v1666 = vunpack.c.h.b16 %v917
    %v1667 = vunpack.c.l.b16 %v918
    %v1668 = vunpack.c.h.b16 %v918
    %v1669 = vunpack.c.l.b16 %v919
    %v1670 = vunpack.c.h.b16 %v919
    %v1671 = vunpack.c.l.b16 %v920
    %v1672 = vunpack.c.h.b16 %v920
    %v1673 = vunpack.c.l.b16 %v921
    %v1674 = vunpack.c.h.b16 %v921
    %v1675 = vunpack.c.l.b16 %v922
    %v1676 = vunpack.c.h.b16 %v922
    %v1677 = vunpack.c.l.b16 %v923
    %v1678 = vunpack.c.h.b16 %v923
    %v1679 = vunpack.c.l.b16 %v924
    %v1680 = vunpack.c.h.b16 %v924
    %v1681 = vunpack.c.l.b16 %v925
    %v1682 = vunpack.c.h.b16 %v925
    %v1683 = vunpack.c.l.b16 %v926
    %v1684 = vunpack.c.h.b16 %v926
    %v1685 = vunpack.c.l.b16 %v927
    %v1686 = vunpack.c.h.b16 %v927
    %v1687 = vunpack.c.l.b16 %v928
    %v1688 = vunpack.c.h.b16 %v928
    %v1689 = vunpack.c.l.b16 %v929
    %v1690 = vunpack.c.h.b16 %v929
    %v1691 = vunpack.c.l.b16 %v930
    %v1692 = vunpack.c.h.b16 %v930
    %v1693 = vunpack.c.l.b16 %v931
    %v1694 = vunpack.c.h.b16 %v931
    %v1695 = vunpack.c.l.b16 %v932
    %v1696 = vunpack.c.h.b16 %v932
    %v1697 = vunpack.c.l.b16 %v933
    %v1698 = vunpack.c.h.b16 %v933
    %v1699 = vunpack.c.l.b16 %v934
    %v1700 = vunpack.c.h.b16 %v934
    %v1701 = vunpack.c.l.b16 %v935
    %v1702 = vunpack.c.h.b16 %v935
    %v1703 = vunpack.c.l.b16 %v936
    %v1704 = vunpack.c.h.b16 %v936
    %v1705 = vunpack.c.l.b16 %v937
    %v1706 = vunpack.c.h.b16 %v937
    %v1707 = vunpack.c.l.b16 %v938
    %v1708 = vunpack.c.h.b16 %v938
    %v1709 = vunpack.c.l.b16 %v939
    %v1710 = vunpack.c.h.b16 %v939
    %v1711 = vunpack.c.l.b16 %v940
    %v1712 = vunpack.c.h.b16 %v940
    %v1713 = vunpack.c.l.b16 %v941
    %v1714 = vunpack.c.h.b16 %v941
    %v1715 = vunpack.c.l.b16 %v942
    %v1716 = vunpack.c.h.b16 %v942
    %v1717 = vunpack.c.l.b16 %v943
    %v1718 = vunpack.c.h.b16 %v943
    %v1719 = vunpack.c.l.b16 %v944
    %v1720 = vunpack.c.h.b16 %v944
    %v1721 = vunpack.c.l.b16 %v945
    %v1722 = vunpack.c.h.b16 %v945
    %v1723 = vunpack.c.l.b16 %v946
    %v1724 = vunpack.c.h.b16 %v946
    %v1725 = vunpack.c.l.b16 %v947
    %v1726 = vunpack.c.h.b16 %v947
    %v1727 = vunpack.c.l.b16 %v948
    %v1728 = vunpack.c.h.b16 %v948
    %v1729 = vunpack.c.l.b16 %v949
    %v1730 = vunpack.c.h.b16 %v949
    %v1731 = vunpack.c.l.b16 %v950
    %v1732 = vunpack.c.h.b16 %v950
    %v1733 = vunpack.c.l.b16 %v951
    %v1734 = vunpack.c.h.b16 %v951
    %v1735 = vunpack.c.l.b16 %v952
    %v1736 = vunpack.c.h.b16 %v952
    %v1737 = vunpack.c.l.b16 %v953
    %v1738 = vunpack.c.h.b16 %v953
    %v1739 = vunpack.c.l.b16 %v954
    %v1740 = vunpack.c.h.b16 %v954
    %v1741 = vunpack.c.l.b16 %v955
    %v1742 = vunpack.c.h.b16 %v955
    %v1743 = vunpack.c.l.b16 %v956
    %v1744 = vunpack.c.h.b16 %v956
    %v1745 = vunpack.c.l.b16 %v957
    %v1746 = vunpack.c.h.b16 %v957
    %v1747 = vunpack.c.l.b16 %v958
    %v1748 = vunpack.c.h.b16 %v958
    %v1749 = vunpack.c.l.b16 %v959
    %v1750 = vunpack.c.h.b16 %v959
    %v1751 = vunpack.c.l.b16 %v960
    %v1752 = vunpack.c.h.b16 %v960
    %v1753 = vunpack.c.l.b16 %v961
    %v1754 = vunpack.c.h.b16 %v961
    %v1755 = vunpack.c.l.b16 %v962
    %v1756 = vunpack.c.h.b16 %v962
    %v1757 = vunpack.c.l.b16 %v963
    %v1758 = vunpack.c.h.b16 %v963
    %v1759 = vunpack.c.l.b16 %v964
    %v1760 = vunpack.c.h.b16 %v964
    %v1761 = vunpack.c.l.b16 %v965
    %v1762 = vunpack.c.h.b16 %v965
    %v1763 = vunpack.c.l.b16 %v966
    %v1764 = vunpack.c.h.b16 %v966
    %v1765 = vunpack.c.l.b16 %v967
    %v1766 = vunpack.c.h.b16 %v967
    %v1767 = vunpack.c.l.b16 %v968
    %v1768 = vunpack.c.h.b16 %v968
    %v1769 = vunpack.c.l.b16 %v969
    %v1770 = vunpack.c.h.b16 %v969
    %v1771 = vunpack.c.l.b16 %v970
    %v1772 = vunpack.c.h.b16 %v970
    %v1773 = vunpack.c.l.b16 %v971
    %v1774 = vunpack.c.h.b16 %v971
    %v1775 = vunpack.c.l.b16 %v972
    %v1776 = vunpack.c.h.b16 %v972
    %v1777 = vunpack.c.l.b16 %v973
    %v1778 = vunpack.c.h.b16 %v973
    %v1779 = vunpack.c.l.b16 %v974
    %v1780 = vunpack.c.h.b16 %v974
    %v1781 = vunpack.c.l.b16 %v975
    %v1782 = vunpack.c.h.b16 %v975
    %v1783 = vunpack.c.l.b16 %v976
    %v1784 = vunpack.c.h.b16 %v976
    %v1785 = vunpack.c.l.b16 %v977
    %v1786 = vunpack.c.h.b16 %v977
    %v1787 = vunpack.c.l.b16 %v978
    %v1788 = vunpack.c.h.b16 %v978
    %v1789 = vunpack.c.l.b16 %v979
    %v1790 = vunpack.c.h.b16 %v979
    %v1791 = vunpack.c.l.b16 %v980
    %v1792 = vunpack.c.h.b16 %v980
    %v1793 = vunpack.c.l.b16 %v981
    %v1794 = vunpack.c.h.b16 %v981
    %v1795 = vunpack.c.l.b16 %v982
    %v1796 = vunpack.c.h.b16 %v982
    %v1797 = vunpack.c.l.b16 %v983
    %v1798 = vunpack.c.h.b16 %v983
    %v1799 = vunpack.c.l.b16 %v984
    %v1800 = vunpack.c.h.b16 %v984
    %v1801 = vunpack.c.l.b16 %v985
    %v1802 = vunpack.c.h.b16 %v985
    %v1803 = vunpack.c.l.b16 %v986
    %v1804 = vunpack.c.h.b16 %v986
    %v1805 = vunpack.c.l.b16 %v987
    %v1806 = vunpack.c.h.b16 %v987
    %v1807 = vunpack.c.l.b16 %v988
    %v1808 = vunpack.c.h.b16 %v988
    %v1809 = vunpack.c.l.b16 %v989
    %v1810 = vunpack.c.h.b16 %v989
    %v1811 = vunpack.c.l.b16 %v990
    %v1812 = vunpack.c.h.b16 %v990
    %v1813 = vunpack.c.l.b16 %v991
    %v1814 = vunpack.c.h.b16 %v991
    %v1815 = vunpack.c.l.b16 %v992
    %v1816 = vunpack.c.h.b16 %v992
    %v1817 = vunpack.c.l.b16 %v993
    %v1818 = vunpack.c.h.b16 %v993
    %v1819 = vunpack.c.l.b16 %v994
    %v1820 = vunpack.c.h.b16 %v994
    %v1821 = vunpack.c.l.b16 %v995
    %v1822 = vunpack.c.h.b16 %v995
    %v1823 = vunpack.c.l.b16 %v996
    %v1824 = vunpack.c.h.b16 %v996
    %v1825 = vunpack.c.l.b16 %v997
    %v1826 = vunpack.c.h.b16 %v997
    %v1827 = vunpack.c.l.b16 %v998
    %v1828 = vunpack.c.h.b16 %v998
    %v1829 = vunpack.c.l.b16 %v999
    %v1830 = vunpack.c.h.b16 %v999
    %v1831 = vunpack.c.l.b16 %v1000
    %v1832 = vunpack.c.h.b16 %v1000
    %v1833 = vunpack.c.l.b16 %v1001
    %v1834 = vunpack.c.h.b16 %v1001
    %v1835 = vunpack.c.l.b16 %v1002
    %v1836 = vunpack.c.h.b16 %v1002
    %v1837 = vunpack.c.l.b16 %v1003
    %v1838 = vunpack.c.h.b16 %v1003
    %v1839 = vunpack.c.l.b16 %v1004
    %v1840 = vunpack.c.h.b16 %v1004
    %v1841 = vunpack.c.l.b16 %v1005
    %v1842 = vunpack.c.h.b16 %v1005
    %v1843 = vunpack.c.l.b16 %v1006
    %v1844 = vunpack.c.h.b16 %v1006
    %v1845 = vunpack.c.l.b16 %v1007
    %v1846 = vunpack.c.h.b16 %v1007
    %v1847 = vunpack.c.l.b16 %v1008
    %v1848 = vunpack.c.h.b16 %v1008
    %v1849 = vunpack.c.l.b16 %v1009
    %v1850 = vunpack.c.h.b16 %v1009
    %v1851 = vunpack.c.l.b16 %v1010
    %v1852 = vunpack.c.h.b16 %v1010
    %v1853 = vunpack.c.l.b16 %v1011
    %v1854 = vunpack.c.h.b16 %v1011
    %v1855 = vunpack.c.l.b16 %v1012
    %v1856 = vunpack.c.h.b16 %v1012
    %v1857 = vunpack.c.l.b16 %v1013
    %v1858 = vunpack.c.h.b16 %v1013
    %v1859 = vunpack.c.l.b16 %v1014
    %v1860 = vunpack.c.h.b16 %v1014
    %v1861 = vunpack.c.l.b16 %v1015
    %v1862 = vunpack.c.h.b16 %v1015
    %v1863 = vunpack.c.l.b16 %v1016
    %v1864 = vunpack.c.h.b16 %v1016
    %v1865 = vunpack.c.l.b16 %v1017
    %v1866 = vunpack.c.h.b16 %v1017
    %v1867 = vunpack.c.l.b16 %v1018
    %v1868 = vunpack.c.h.b16 %v1018
    %v1869 = vunpack.c.l.b16 %v1019
    %v1870 = vunpack.c.h.b16 %v1019
    %v1871 = vunpack.c.l.b16 %v1020
    %v1872 = vunpack.c.h.b16 %v1020
    %v1873 = vunpack.c.l.b16 %v1021
    %v1874 = vunpack.c.h.b16 %v1021
    %v1875 = vunpack.c.l.b16 %v1022
    %v1876 = vunpack.c.h.b16 %v1022
    %v1877 = vunpack.c.l.b16 %v1023
    %v1878 = vunpack.c.h.b16 %v1023
    %v1879 = vunpack.c.l.b16 %v1024
    %v1880 = vunpack.c.h.b16 %v1024
    %v1881 = vunpack.c.l.b16 %v1025
    %v1882 = vunpack.c.h.b16 %v1025
    %v1883 = vunpack.c.l.b16 %v1026
    %v1884 = vunpack.c.h.b16 %v1026
    %v1885 = vunpack.c.l.b16 %v1027
    %v1886 = vunpack.c.h.b16 %v1027
    %v1887 = vunpack.c.l.b16 %v1028
    %v1888 = vunpack.c.h.b16 %v1028
    %v1889 = vunpack.c.l.b16 %v1029
    %v1890 = vunpack.c.h.b16 %v1029
    %v1891 = vunpack.c.l.b16 %v1030
    %v1892 = vunpack.c.h.b16 %v1030
    %v1893 = vunpack.c.l.b16 %v1031
    %v1894 = vunpack.c.h.b16 %v1031
    %v1895 = vunpack.c.l.b16 %v1032
    %v1896 = vunpack.c.h.b16 %v1032
    %v1897 = vunpack.c.l.b16 %v1033
    %v1898 = vunpack.c.h.b16 %v1033
    %v1899 = vunpack.c.l.b16 %v1034
    %v1900 = vunpack.c.h.b16 %v1034
    %v1901 = vunpack.c.l.b16 %v1035
    %v1902 = vunpack.c.h.b16 %v1035
    %v1903 = vunpack.c.l.b16 %v1036
    %v1904 = vunpack.c.h.b16 %v1036
    %v1905 = vunpack.c.l.b16 %v1037
    %v1906 = vunpack.c.h.b16 %v1037
    %v1907 = vunpack.c.l.b16 %v1038
    %v1908 = vunpack.c.h.b16 %v1038
    %v1909 = vunpack.c.l.b16 %v1039
    %v1910 = vunpack.c.h.b16 %v1039
    %v1911 = vunpack.c.l.b16 %v1040
    %v1912 = vunpack.c.h.b16 %v1040
    %v1913 = vunpack.c.l.b16 %v1041
    %v1914 = vunpack.c.h.b16 %v1041
    %v1915 = vunpack.c.l.b16 %v1042
    %v1916 = vunpack.c.h.b16 %v1042
    %v1917 = vunpack.c.l.b16 %v1043
    %v1918 = vunpack.c.h.b16 %v1043
    %v1919 = vunpack.c.l.b16 %v1044
    %v1920 = vunpack.c.h.b16 %v1044
    %v1921 = vunpack.c.l.b16 %v1045
    %v1922 = vunpack.c.h.b16 %v1045
    %v1923 = vunpack.c.l.b16 %v1046
    %v1924 = vunpack.c.h.b16 %v1046
    %v1925 = vunpack.c.l.b16 %v1047
    %v1926 = vunpack.c.h.b16 %v1047
    %v1927 = vunpack.c.l.b16 %v1048
    %v1928 = vunpack.c.h.b16 %v1048
    %v1929 = vunpack.c.l.b16 %v1049
    %v1930 = vunpack.c.h.b16 %v1049
    %v1931 = vunpack.c.l.b16 %v1050
    %v1932 = vunpack.c.h.b16 %v1050
    %v1933 = vunpack.c.l.b16 %v1051
    %v1934 = vunpack.c.h.b16 %v1051
    %v1935 = vunpack.c.l.b16 %v1052
    %v1936 = vunpack.c.h.b16 %v1052
    %v1937 = vunpack.c.l.b16 %v1053
    %v1938 = vunpack.c.h.b16 %v1053
    %v1939 = vunpack.c.l.b16 %v1054
    %v1940 = vunpack.c.h.b16 %v1054
    %v1941 = vunpack.c.l.b16 %v1055
    %v1942 = vunpack.c.h.b16 %v1055
    %v1943 = vunpack.c.l.b16 %v1056
    %v1944 = vunpack.c.h.b16 %v1056
    %v1945 = vunpack.c.l.b16 %v1057
    %v1946 = vunpack.c.h.b16 %v1057
    %v1947 = vunpack.c.l.b16 %v1058
    %v1948 = vunpack.c.h.b16 %v1058
    %v1949 = vunpack.c.l.b16 %v1059
    %v1950 = vunpack.c.h.b16 %v1059
    %v1951 = vunpack.c.l.b16 %v1060
    %v1952 = vunpack.c.h.b16 %v1060
    %v1953 = vunpack.c.l.b16 %v1061
    %v1954 = vunpack.c.h.b16 %v1061
    %v1955 = vunpack.c.l.b16 %v1062
    %v1956 = vunpack.c.h.b16 %v1062
    %v1957 = vunpack.c.l.b16 %v1063
    %v1958 = vunpack.c.h.b16 %v1063
    %v1959 = vunpack.c.l.b16 %v1064
    %v1960 = vunpack.c.h.b16 %v1064
    %v1961 = vunpack.c.l.b16 %v1065
    %v1962 = vunpack.c.h.b16 %v1065
    %v1963 = vunpack.c.l.b16 %v1066
    %v1964 = vunpack.c.h.b16 %v1066
    %v1965 = vunpack.c.l.b16 %v1067
    %v1966 = vunpack.c.h.b16 %v1067
    %v1967 = vunpack.c.l.b16 %v1068
    %v1968 = vunpack.c.h.b16 %v1068
    %v1969 = vunpack.c.l.b16 %v1069
    %v1970 = vunpack.c.h.b16 %v1069
    %v1971 = vunpack.c.l.b16 %v1070
    %v1972 = vunpack.c.h.b16 %v1070
    %v1973 = vunpack.c.l.b16 %v1071
    %v1974 = vunpack.c.h.b16 %v1071
    %v1975 = vunpack.c.l.b16 %v1072
    %v1976 = vunpack.c.h.b16 %v1072
    %v1977 = vunpack.c.l.b16 %v1073
    %v1978 = vunpack.c.h.b16 %v1073
    %v1979 = vunpack.c.l.b16 %v1074
    %v1980 = vunpack.c.h.b16 %v1074
    %v1981 = vunpack.c.l.b16 %v1075
    %v1982 = vunpack.c.h.b16 %v1075
    %v1983 = vunpack.c.l.b16 %v1076
    %v1984 = vunpack.c.h.b16 %v1076
    %v1985 = vunpack.c.l.b16 %v1077
    %v1986 = vunpack.c.h.b16 %v1077
    %v1987 = vunpack.c.l.b16 %v1078
    %v1988 = vunpack.c.h.b16 %v1078
    %v1989 = vunpack.c.l.b16 %v1079
    %v1990 = vunpack.c.h.b16 %v1079
    %v1991 = vunpack.c.l.b16 %v1080
    %v1992 = vunpack.c.h.b16 %v1080
    %v1993 = vunpack.c.l.b16 %v1081
    %v1994 = vunpack.c.h.b16 %v1081
    %v1995 = vunpack.c.l.b16 %v1082
    %v1996 = vunpack.c.h.b16 %v1082
    %v1997 = vunpack.c.l.b16 %v1083
    %v1998 = vunpack.c.h.b16 %v1083
    %v1999 = vunpack.c.l.b16 %v1084
    %v2000 = vunpack.c.h.b16 %v1084
    %v2001 = vunpack.c.l.b16 %v1085
    %v2002 = vunpack.c.h.b16 %v1085
    %v2003 = vunpack.c.l.b16 %v1086
    %v2004 = vunpack.c.h.b16 %v1086
    %v2005 = vunpack.c.l.b16 %v1087
    %v2006 = vunpack.c.h.b16 %v1087
    %v2007 = vunpack.c.l.b16 %v1088
    %v2008 = vunpack.c.h.b16 %v1088
    %v2009 = vunpack.c.l.b16 %v1089
    %v2010 = vunpack.c.h.b16 %v1089
    %v2011 = vunpack.c.l.b16 %v1090
    %v2012 = vunpack.c.h.b16 %v1090
    %v2013 = vunpack.c.l.b16 %v1091
    %v2014 = vunpack.c.h.b16 %v1091
    %v2015 = vunpack.c.l.b16 %v1092
    %v2016 = vunpack.c.h.b16 %v1092
    %v2017 = vunpack.c.l.b16 %v1093
    %v2018 = vunpack.c.h.b16 %v1093
    %v2019 = vunpack.c.l.b16 %v1094
    %v2020 = vunpack.c.h.b16 %v1094
    %v2021 = vunpack.c.l.b16 %v1095
    %v2022 = vunpack.c.h.b16 %v1095
    %v2023 = vunpack.c.l.b16 %v1096
    %v2024 = vunpack.c.h.b16 %v1096
    %v2025 = vunpack.c.l.b16 %v1097
    %v2026 = vunpack.c.h.b16 %v1097
    %v2027 = vunpack.c.l.b16 %v1098
    %v2028 = vunpack.c.h.b16 %v1098
    %v2029 = vunpack.c.l.b16 %v1099
    %v2030 = vunpack.c.h.b16 %v1099
    %v2031 = vunpack.c.l.b16 %v1100
    %v2032 = vunpack.c.h.b16 %v1100
    %v2033 = vunpack.c.l.b16 %v1101
    %v2034 = vunpack.c.h.b16 %v1101
    %v2035 = vunpack.c.l.b16 %v1102
    %v2036 = vunpack.c.h.b16 %v1102
    %v2037 = vunpack.c.l.b16 %v1103
    %v2038 = vunpack.c.h.b16 %v1103
    %v2039 = vunpack.c.l.b16 %v1104
    %v2040 = vunpack.c.h.b16 %v1104
    %v2041 = vunpack.c.l.b16 %v1105
    %v2042 = vunpack.c.h.b16 %v1105
    %v2043 = vunpack.c.l.b16 %v1106
    %v2044 = vunpack.c.h.b16 %v1106
    %v2045 = vunpack.c.l.b16 %v1107
    %v2046 = vunpack.c.h.b16 %v1107
    %v2047 = vunpack.c.l.b16 %v1108
    %v2048 = vunpack.c.h.b16 %v1108
    %v2049 = vunpack.c.l.b16 %v1109
    %v2050 = vunpack.c.h.b16 %v1109
    %v2051 = vunpack.c.l.b16 %v1110
    %v2052 = vunpack.c.h.b16 %v1110
    %v2053 = vunpack.c.l.b16 %v1111
    %v2054 = vunpack.c.h.b16 %v1111
    %v2055 = vunpack.c.l.b16 %v1112
    %v2056 = vunpack.c.h.b16 %v1112
    %v2057 = vunpack.c.l.b16 %v1113
    %v2058 = vunpack.c.h.b16 %v1113
    %v2059 = vunpack.c.l.b16 %v1114
    %v2060 = vunpack.c.h.b16 %v1114
    %v2061 = vunpack.c.l.b16 %v1115
    %v2062 = vunpack.c.h.b16 %v1115
    %v2063 = vunpack.c.l.b16 %v1116
    %v2064 = vunpack.c.h.b16 %v1116
    %v2065 = vunpack.c.l.b16 %v1117
    %v2066 = vunpack.c.h.b16 %v1117
    %v2067 = vunpack.c.l.b16 %v1118
    %v2068 = vunpack.c.h.b16 %v1118
    %v2069 = vunpack.c.l.b16 %v1119
    %v2070 = vunpack.c.h.b16 %v1119
    %v2071 = vunpack.c.l.b16 %v1120
    %v2072 = vunpack.c.h.b16 %v1120
    %v2073 = vunpack.c.l.b16 %v1121
    %v2074 = vunpack.c.h.b16 %v1121
    %v2075 = vunpack.c.l.b16 %v1122
    %v2076 = vunpack.c.h.b16 %v1122
    %v2077 = vunpack.c.l.b16 %v1123
    %v2078 = vunpack.c.h.b16 %v1123
    %v2079 = vunpack.c.l.b16 %v1124
    %v2080 = vunpack.c.h.b16 %v1124
    %v2081 = vunpack.c.l.b16 %v1125
    %v2082 = vunpack.c.h.b16 %v1125
    %v2083 = vunpack.c.l.b16 %v1126
    %v2084 = vunpack.c.h.b16 %v1126
    %v2085 = vunpack.c.l.b16 %v1127
    %v2086 = vunpack.c.h.b16 %v1127
    %v2087 = vunpack.c.l.b16 %v1128
    %v2088 = vunpack.c.h.b16 %v1128
    %v2089 = vunpack.c.l.b16 %v1129
    %v2090 = vunpack.c.h.b16 %v1129
    %v2091 = vunpack.c.l.b16 %v1130
    %v2092 = vunpack.c.h.b16 %v1130
    %v2093 = vunpack.c.l.b16 %v1131
    %v2094 = vunpack.c.h.b16 %v1131
    %v2095 = vunpack.c.l.b16 %v1132
    %v2096 = vunpack.c.h.b16 %v1132
    %v2097 = vunpack.c.l.b16 %v1133
    %v2098 = vunpack.c.h.b16 %v1133
    %v2099 = vunpack.c.l.b16 %v1134
    %v2100 = vunpack.c.h.b16 %v1134
    %v2101 = vunpack.c.l.b16 %v1135
    %v2102 = vunpack.c.h.b16 %v1135
    %v2103 = vunpack.c.l.b16 %v1136
    %v2104 = vunpack.c.h.b16 %v1136
    %v2105 = vunpack.c.l.b16 %v1137
    %v2106 = vunpack.c.h.b16 %v1137
    %v2107 = vunpack.c.l.b16 %v1138
    %v2108 = vunpack.c.h.b16 %v1138
    %v2109 = vunpack.c.l.b16 %v1139
    %v2110 = vunpack.c.h.b16 %v1139
    %v2111 = vunpack.c.l.b16 %v1140
    %v2112 = vunpack.c.h.b16 %v1140
    %v2113 = vunpack.c.l.b16 %v1141
    %v2114 = vunpack.c.h.b16 %v1141
    %v2115 = vunpack.c.l.b16 %v1142
    %v2116 = vunpack.c.h.b16 %v1142
    %v2117 = vunpack.c.l.b16 %v1143
    %v2118 = vunpack.c.h.b16 %v1143
    %v2119 = vunpack.c.l.b16 %v1144
    %v2120 = vunpack.c.h.b16 %v1144
    %v2121 = vunpack.c.l.b16 %v1145
    %v2122 = vunpack.c.h.b16 %v1145
    %v2123 = vunpack.c.l.b16 %v1146
    %v2124 = vunpack.c.h.b16 %v1146
    %v2125 = vunpack.c.l.b16 %v1147
    %v2126 = vunpack.c.h.b16 %v1147
    %v2127 = vunpack.c.l.b16 %v1148
    %v2128 = vunpack.c.h.b16 %v1148
    %v2129 = vunpack.c.l.b16 %v1149
    %v2130 = vunpack.c.h.b16 %v1149
    %v2131 = vunpack.c.l.b16 %v1150
    %v2132 = vunpack.c.h.b16 %v1150
    %v2133 = vpack.c.b16 %v1497, %v1493
    %v2134 = vpack.c.b16 %v1498, %v1494
    %v2135 = vpack.c.b16 %v1499, %v1495
    %v2136 = vpack.c.b16 %v1500, %v1496
    %v2137 = vpack.c.b16 %v1505, %v1501
    %v2138 = vpack.c.b16 %v1506, %v1502
    %v2139 = vpack.c.b16 %v1507, %v1503
    %v2140 = vpack.c.b16 %v1508, %v1504
    %v2141 = vpack.c.b16 %v1513, %v1509
    %v2142 = vpack.c.b16 %v1514, %v1510
    %v2143 = vpack.c.b16 %v1515, %v1511
    %v2144 = vpack.c.b16 %v1516, %v1512
    %v2145 = vpack.c.b16 %v1521, %v1517
    %v2146 = vpack.c.b16 %v1522, %v1518
    %v2147 = vpack.c.b16 %v1523, %v1519
    %v2148 = vpack.c.b16 %v1524, %v1520
    %v2149 = vpack.c.b16 %v1529, %v1525
    %v2150 = vpack.c.b16 %v1530, %v1526
    %v2151 = vpack.c.b16 %v1531, %v1527
    %v2152 = vpack.c.b16 %v1532, %v1528
    %v2153 = vpack.c.b16 %v1537, %v1533
    %v2154 = vpack.c.b16 %v1538, %v1534
    %v2155 = vpack.c.b16 %v1539, %v1535
    %v2156 = vpack.c.b16 %v1540, %v1536
    %v2157 = vpack.c.b16 %v1545, %v1541
    %v2158 = vpack.c.b16 %v1546, %v1542
    %v2159 = vpack.c.b16 %v1547, %v1543
    %v2160 = vpack.c.b16 %v1548, %v1544
    %v2161 = vpack.c.b16 %v1553, %v1549
    %v2162 = vpack.c.b16 %v1554, %v1550
    %v2163 = vpack.c.b16 %v1555, %v1551
    %v2164 = vpack.c.b16 %v1556, %v1552
    %v2165 = vpack.c.b16 %v1561, %v1557
    %v2166 = vpack.c.b16 %v1562, %v1558
    %v2167 = vpack.c.b16 %v1563, %v1559
    %v2168 = vpack.c.b16 %v1564, %v1560
    %v2169 = vpack.c.b16 %v1569, %v1565
    %v2170 = vpack.c.b16 %v1570, %v1566
    %v2171 = vpack.c.b16 %v1571, %v1567
    %v2172 = vpack.c.b16 %v1572, %v1568
    %v2173 = vpack.c.b16 %v1577, %v1573
    %v2174 = vpack.c.b16 %v1578, %v1574
    %v2175 = vpack.c.b16 %v1579, %v1575
    %v2176 = vpack.c.b16 %v1580, %v1576
    %v2177 = vpack.c.b16 %v1585, %v1581
    %v2178 = vpack.c.b16 %v1586, %v1582
    %v2179 = vpack.c.b16 %v1587, %v1583
    %v2180 = vpack.c.b16 %v1588, %v1584
    %v2181 = vpack.c.b16 %v1593, %v1589
    %v2182 = vpack.c.b16 %v1594, %v1590
    %v2183 = vpack.c.b16 %v1595, %v1591
    %v2184 = vpack.c.b16 %v1596, %v1592
    %v2185 = vpack.c.b16 %v1601, %v1597
    %v2186 = vpack.c.b16 %v1602, %v1598
    %v2187 = vpack.c.b16 %v1603, %v1599
    %v2188 = vpack.c.b16 %v1604, %v1600
    %v2189 = vpack.c.b16 %v1609, %v1605
    %v2190 = vpack.c.b16 %v1610, %v1606
    %v2191 = vpack.c.b16 %v1611, %v1607
    %v2192 = vpack.c.b16 %v1612, %v1608
    %v2193 = vpack.c.b16 %v1617, %v1613
    %v2194 = vpack.c.b16 %v1618, %v1614
    %v2195 = vpack.c.b16 %v1619, %v1615
    %v2196 = vpack.c.b16 %v1620, %v1616
    %v2197 = vpack.c.b16 %v1625, %v1621
    %v2198 = vpack.c.b16 %v1626, %v1622
    %v2199 = vpack.c.b16 %v1627, %v1623
    %v2200 = vpack.c.b16 %v1628, %v1624
    %v2201 = vpack.c.b16 %v1633, %v1629
    %v2202 = vpack.c.b16 %v1634, %v1630
    %v2203 = vpack.c.b16 %v1635, %v1631
    %v2204 = vpack.c.b16 %v1636, %v1632
    %v2205 = vpack.c.b16 %v1641, %v1637
    %v2206 = vpack.c.b16 %v1642, %v1638
    %v2207 = vpack.c.b16 %v1643, %v1639
    %v2208 = vpack.c.b16 %v1644, %v1640
    %v2209 = vpack.c.b16 %v1649, %v1645
    %v2210 = vpack.c.b16 %v1650, %v1646
    %v2211 = vpack.c.b16 %v1651, %v1647
    %v2212 = vpack.c.b16 %v1652, %v1648
    %v2213 = vpack.c.b16 %v1657, %v1653
    %v2214 = vpack.c.b16 %v1658, %v1654
    %v2215 = vpack.c.b16 %v1659, %v1655
    %v2216 = vpack.c.b16 %v1660, %v1656
    %v2217 = vpack.c.b16 %v1665, %v1661
    %v2218 = vpack.c.b16 %v1666, %v1662
    %v2219 = vpack.c.b16 %v1667, %v1663
    %v2220 = vpack.c.b16 %v1668, %v1664
    %v2221 = vpack.c.b16 %v1673, %v1669
    %v2222 = vpack.c.b16 %v1674, %v1670
    %v2223 = vpack.c.b16 %v1675, %v1671
    %v2224 = vpack.c.b16 %v1676, %v1672
    %v2225 = vpack.c.b16 %v1681, %v1677
    %v2226 = vpack.c.b16 %v1682, %v1678
    %v2227 = vpack.c.b16 %v1683, %v1679
    %v2228 = vpack.c.b16 %v1684, %v1680
    %v2229 = vpack.c.b16 %v1689, %v1685
    %v2230 = vpack.c.b16 %v1690, %v1686
    %v2231 = vpack.c.b16 %v1691, %v1687
    %v2232 = vpack.c.b16 %v1692, %v1688
    %v2233 = vpack.c.b16 %v1697, %v1693
    %v2234 = vpack.c.b16 %v1698, %v1694
    %v2235 = vpack.c.b16 %v1699, %v1695
    %v2236 = vpack.c.b16 %v1700, %v1696
    %v2237 = vpack.c.b16 %v1705, %v1701
    %v2238 = vpack.c.b16 %v1706, %v1702
    %v2239 = vpack.c.b16 %v1707, %v1703
    %v2240 = vpack.c.b16 %v1708, %v1704
    %v2241 = vpack.c.b16 %v1713, %v1709
    %v2242 = vpack.c.b16 %v1714, %v1710
    %v2243 = vpack.c.b16 %v1715, %v1711
    %v2244 = vpack.c.b16 %v1716, %v1712
    %v2245 = vpack.c.b16 %v1721, %v1717
    %v2246 = vpack.c.b16 %v1722, %v1718
    %v2247 = vpack.c.b16 %v1723, %v1719
    %v2248 = vpack.c.b16 %v1724, %v1720
    %v2249 = vpack.c.b16 %v1729, %v1725
    %v2250 = vpack.c.b16 %v1730, %v1726
    %v2251 = vpack.c.b16 %v1731, %v1727
    %v2252 = vpack.c.b16 %v1732, %v1728
    %v2253 = vpack.c.b16 %v1737, %v1733
    %v2254 = vpack.c.b16 %v1738, %v1734
    %v2255 = vpack.c.b16 %v1739, %v1735
    %v2256 = vpack.c.b16 %v1740, %v1736
    %v2257 = vpack.c.b16 %v1745, %v1741
    %v2258 = vpack.c.b16 %v1746, %v1742
    %v2259 = vpack.c.b16 %v1747, %v1743
    %v2260 = vpack.c.b16 %v1748, %v1744
    %v2261 = vpack.c.b16 %v1753, %v1749
    %v2262 = vpack.c.b16 %v1754, %v1750
    %v2263 = vpack.c.b16 %v1755, %v1751
    %v2264 = vpack.c.b16 %v1756, %v1752
    %v2265 = vpack.c.b16 %v1761, %v1757
    %v2266 = vpack.c.b16 %v1762, %v1758
    %v2267 = vpack.c.b16 %v1763, %v1759
    %v2268 = vpack.c.b16 %v1764, %v1760
    %v2269 = vpack.c.b16 %v1769, %v1765
    %v2270 = vpack.c.b16 %v1770, %v1766
    %v2271 = vpack.c.b16 %v1771, %v1767
    %v2272 = vpack.c.b16 %v1772, %v1768
    %v2273 = vpack.c.b16 %v1777, %v1773
    %v2274 = vpack.c.b16 %v1778, %v1774
    %v2275 = vpack.c.b16 %v1779, %v1775
    %v2276 = vpack.c.b16 %v1780, %v1776
    %v2277 = vpack.c.b16 %v1785, %v1781
    %v2278 = vpack.c.b16 %v1786, %v1782
    %v2279 = vpack.c.b16 %v1787, %v1783
    %v2280 = vpack.c.b16 %v1788, %v1784
    %v2281 = vpack.c.b16 %v1793, %v1789
    %v2282 = vpack.c.b16 %v1794, %v1790
    %v2283 = vpack.c.b16 %v1795, %v1791
    %v2284 = vpack.c.b16 %v1796, %v1792
    %v2285 = vpack.c.b16 %v1801, %v1797
    %v2286 = vpack.c.b16 %v1802, %v1798
    %v2287 = vpack.c.b16 %v1803, %v1799
    %v2288 = vpack.c.b16 %v1804, %v1800
    %v2289 = vpack.c.b16 %v1809, %v1805
    %v2290 = vpack.c.b16 %v1810, %v1806
    %v2291 = vpack.c.b16 %v1811, %v1807
    %v2292 = vpack.c.b16 %v1812, %v1808
    %v2293 = vpack.c.b16 %v1817, %v1813
    %v2294 = vpack.c.b16 %v1818, %v1814
    %v2295 = vpack.c.b16 %v1819, %v1815
    %v2296 = vpack.c.b16 %v1820, %v1816
    %v2297 = vpack.c.b16 %v1825, %v1821
    %v2298 = vpack.c.b16 %v1826, %v1822
    %v2299 = vpack.c.b16 %v1827, %v1823
    %v2300 = vpack.c.b16 %v1828, %v1824
    %v2301 = vpack.c.b16 %v1833, %v1829
    %v2302 = vpack.c.b16 %v1834, %v1830
    %v2303 = vpack.c.b16 %v1835, %v1831
    %v2304 = vpack.c.b16 %v1836, %v1832
    %v2305 = vpack.c.b16 %v1841, %v1837
    %v2306 = vpack.c.b16 %v1842, %v1838
    %v2307 = vpack.c.b16 %v1843, %v1839
    %v2308 = vpack.c.b16 %v1844, %v1840
    %v2309 = vpack.c.b16 %v1849, %v1845
    %v2310 = vpack.c.b16 %v1850, %v1846
    %v2311 = vpack.c.b16 %v1851, %v1847
    %v2312 = vpack.c.b16 %v1852, %v1848
    %v2313 = vpack.c.b16 %v1857, %v1853
    %v2314 = vpack.c.b16 %v1858, %v1854
    %v2315 = vpack.c.b16 %v1859, %v1855
    %v2316 = vpack.c.b16 %v1860, %v1856
    %v2317 = vpack.c.b16 %v1865, %v1861
    %v2318 = vpack.c.b16 %v1866, %v1862
    %v2319 = vpack.c.b16 %v1867, %v1863
    %v2320 = vpack.c.b16 %v1868, %v1864
    %v2321 = vpack.c.b16 %v1873, %v1869
    %v2322 = vpack.c.b16 %v1874, %v1870
    %v2323 = vpack.c.b16 %v1875, %v1871
    %v2324 = vpack.c.b16 %v1876, %v1872
    %v2325 = vpack.c.b16 %v1881, %v1877
    %v2326 = vpack.c.b16 %v1882, %v1878
    %v2327 = vpack.c.b16 %v1883, %v1879
    %v2328 = vpack.c.b16 %v1884, %v1880
    %v2329 = vpack.c.b16 %v1889, %v1885
    %v2330 = vpack.c.b16 %v1890, %v1886
    %v2331 = vpack.c.b16 %v1891, %v1887
    %v2332 = vpack.c.b16 %v1892, %v1888
    %v2333 = vpack.c.b16 %v1897, %v1893
    %v2334 = vpack.c.b16 %v1898, %v1894
    %v2335 = vpack.c.b16 %v1899, %v1895
    %v2336 = vpack.c.b16 %v1900, %v1896
    %v2337 = vpack.c.b16 %v1905, %v1901
    %v2338 = vpack.c.b16 %v1906, %v1902
    %v2339 = vpack.c.b16 %v1907, %v1903
    %v2340 = vpack.c.b16 %v1908, %v1904
    %v2341 = vpack.c.b16 %v1913, %v1909
    %v2342 = vpack.c.b16 %v1914, %v1910
    %v2343 = vpack.c.b16 %v1915, %v1911
    %v2344 = vpack.c.b16 %v1916, %v1912
    %v2345 = vpack.c.b16 %v1921, %v1917
    %v2346 = vpack.c.b16 %v1922, %v1918
    %v2347 = vpack.c.b16 %v1923, %v1919
    %v2348 = vpack.c.b16 %v1924, %v1920
    %v2349 = vpack.c.b16 %v1929, %v1925
    %v2350 = vpack.c.b16 %v1930, %v1926
    %v2351 = vpack.c.b16 %v1931, %v1927
    %v2352 = vpack.c.b16 %v1932, %v1928
    %v2353 = vpack.c.b16 %v1937, %v1933
    %v2354 = vpack.c.b16 %v1938, %v1934
    %v2355 = vpack.c.b16 %v1939, %v1935
    %v2356 = vpack.c.b16 %v1940, %v1936
    %v2357 = vpack.c.b16 %v1945, %v1941
    %v2358 = vpack.c.b16 %v1946, %v1942
    %v2359 = vpack.c.b16 %v1947, %v1943
    %v2360 = vpack.c.b16 %v1948, %v1944
    %v2361 = vpack.c.b16 %v1953, %v1949
    %v2362 = vpack.c.b16 %v1954, %v1950
    %v2363 = vpack.c.b16 %v1955, %v1951
    %v2364 = vpack.c.b16 %v1956, %v1952
    %v2365 = vpack.c.b16 %v1961, %v1957
    %v2366 = vpack.c.b16 %v1962, %v1958
    %v2367 = vpack.c.b16 %v1963, %v1959
    %v2368 = vpack.c.b16 %v1964, %v1960
    %v2369 = vpack.c.b16 %v1969, %v1965
    %v2370 = vpack.c.b16 %v1970, %v1966
    %v2371 = vpack.c.b16 %v1971, %v1967
    %v2372 = vpack.c.b16 %v1972, %v1968
    %v2373 = vpack.c.b16 %v1977, %v1973
    %v2374 = vpack.c.b16 %v1978, %v1974
    %v2375 = vpack.c.b16 %v1979, %v1975
    %v2376 = vpack.c.b16 %v1980, %v1976
    %v2377 = vpack.c.b16 %v1985, %v1981
    %v2378 = vpack.c.b16 %v1986, %v1982
    %v2379 = vpack.c.b16 %v1987, %v1983
    %v2380 = vpack.c.b16 %v1988, %v1984
    %v2381 = vpack.c.b16 %v1993, %v1989
    %v2382 = vpack.c.b16 %v1994, %v1990
    %v2383 = vpack.c.b16 %v1995, %v1991
    %v2384 = vpack.c.b16 %v1996, %v1992
    %v2385 = vpack.c.b16 %v2001, %v1997
    %v2386 = vpack.c.b16 %v2002, %v1998
    %v2387 = vpack.c.b16 %v2003, %v1999
    %v2388 = vpack.c.b16 %v2004, %v2000
    %v2389 = vpack.c.b16 %v2009, %v2005
    %v2390 = vpack.c.b16 %v2010, %v2006
    %v2391 = vpack.c.b16 %v2011, %v2007
    %v2392 = vpack.c.b16 %v2012, %v2008
    %v2393 = vpack.c.b16 %v2017, %v2013
    %v2394 = vpack.c.b16 %v2018, %v2014
    %v2395 = vpack.c.b16 %v2019, %v2015
    %v2396 = vpack.c.b16 %v2020, %v2016
    %v2397 = vpack.c.b16 %v2025, %v2021
    %v2398 = vpack.c.b16 %v2026, %v2022
    %v2399 = vpack.c.b16 %v2027, %v2023
    %v2400 = vpack.c.b16 %v2028, %v2024
    %v2401 = vpack.c.b16 %v2033, %v2029
    %v2402 = vpack.c.b16 %v2034, %v2030
    %v2403 = vpack.c.b16 %v2035, %v2031
    %v2404 = vpack.c.b16 %v2036, %v2032
    %v2405 = vpack.c.b16 %v2041, %v2037
    %v2406 = vpack.c.b16 %v2042, %v2038
    %v2407 = vpack.c.b16 %v2043, %v2039
    %v2408 = vpack.c.b16 %v2044, %v2040
    %v2409 = vpack.c.b16 %v2049, %v2045
    %v2410 = vpack.c.b16 %v2050, %v2046
    %v2411 = vpack.c.b16 %v2051, %v2047
    %v2412 = vpack.c.b16 %v2052, %v2048
    %v2413 = vpack.c.b16 %v2057, %v2053
    %v2414 = vpack.c.b16 %v2058, %v2054
    %v2415 = vpack.c.b16 %v2059, %v2055
    %v2416 = vpack.c.b16 %v2060, %v2056
    %v2417 = vpack.c.b16 %v2065, %v2061
    %v2418 = vpack.c.b16 %v2066, %v2062
    %v2419 = vpack.c.b16 %v2067, %v2063
    %v2420 = vpack.c.b16 %v2068, %v2064
    %v2421 = vpack.c.b16 %v2073, %v2069
    %v2422 = vpack.c.b16 %v2074, %v2070
    %v2423 = vpack.c.b16 %v2075, %v2071
    %v2424 = vpack.c.b16 %v2076, %v2072
    %v2425 = vpack.c.b16 %v2081, %v2077
    %v2426 = vpack.c.b16 %v2082, %v2078
    %v2427 = vpack.c.b16 %v2083, %v2079
    %v2428 = vpack.c.b16 %v2084, %v2080
    %v2429 = vpack.c.b16 %v2089, %v2085
    %v2430 = vpack.c.b16 %v2090, %v2086
    %v2431 = vpack.c.b16 %v2091, %v2087
    %v2432 = vpack.c.b16 %v2092, %v2088
    %v2433 = vpack.c.b16 %v2097, %v2093
    %v2434 = vpack.c.b16 %v2098, %v2094
    %v2435 = vpack.c.b16 %v2099, %v2095
    %v2436 = vpack.c.b16 %v2100, %v2096
    %v2437 = vpack.c.b16 %v2105, %v2101
    %v2438 = vpack.c.b16 %v2106, %v2102
    %v2439 = vpack.c.b16 %v2107, %v2103
    %v2440 = vpack.c.b16 %v2108, %v2104
    %v2441 = vpack.c.b16 %v2113, %v2109
    %v2442 = vpack.c.b16 %v2114, %v2110
    %v2443 = vpack.c.b16 %v2115, %v2111
    %v2444 = vpack.c.b16 %v2116, %v2112
    %v2445 = vpack.c.b16 %v2121, %v2117
    %v2446 = vpack.c.b16 %v2122, %v2118
    %v2447 = vpack.c.b16 %v2123, %v2119
    %v2448 = vpack.c.b16 %v2124, %v2120
    %v2449 = vpack.c.b16 %v2129, %v2125
    %v2450 = vpack.c.b16 %v2130, %v2126
    %v2451 = vpack.c.b16 %v2131, %v2127
    %v2452 = vpack.c.b16 %v2132, %v2128
    %2773 = vmatprep.subr.bf16.mxu0 %v2134
    %2774 = vmatpush1.bf16.msra.mxu0 %v2133
    %2775 = vmatprep.subr.bf16.mxu0 %v2138
    %2776 = vmatpush1.bf16.msra.mxu0 %v2137
    %2777 = vmatprep.subr.bf16.mxu0 %v2142
    %2778 = vmatpush1.bf16.msra.mxu0 %v2141
    %2779 = vmatprep.subr.bf16.mxu0 %v2146
    %2780 = vmatpush1.bf16.msra.mxu0 %v2145
    %2781 = vmatprep.subr.bf16.mxu0 %v2150
    %2782 = vmatpush1.bf16.msra.mxu0 %v2149
    %2783 = vmatprep.subr.bf16.mxu0 %v2154
    %2784 = vmatpush1.bf16.msra.mxu0 %v2153
    %2785 = vmatprep.subr.bf16.mxu0 %v2158
    %2786 = vmatpush1.bf16.msra.mxu0 %v2157
    %2787 = vmatprep.subr.bf16.mxu0 %v2162
    %2788 = vmatpush1.bf16.msra.mxu0 %v2161
    %2789 = vmatprep.subr.bf16.mxu0 %v2166
    %2790 = vmatpush1.bf16.msra.mxu0 %v2165
    %2791 = vmatprep.subr.bf16.mxu0 %v2170
    %2792 = vmatpush1.bf16.msra.mxu0 %v2169
    %2793 = vmatprep.subr.bf16.mxu0 %v2174
    %2794 = vmatpush1.bf16.msra.mxu0 %v2173
    %2795 = vmatprep.subr.bf16.mxu0 %v2178
    %2796 = vmatpush1.bf16.msra.mxu0 %v2177
    %2797 = vmatprep.subr.bf16.mxu0 %v2182
    %2798 = vmatpush1.bf16.msra.mxu0 %v2181
    %2799 = vmatprep.subr.bf16.mxu0 %v2186
    %2800 = vmatpush1.bf16.msra.mxu0 %v2185
    %2801 = vmatprep.subr.bf16.mxu0 %v2190
    %2802 = vmatpush1.bf16.msra.mxu0 %v2189
    %2803 = vmatprep.subr.bf16.mxu0 %v2194
    %2804 = vmatpush1.bf16.msra.mxu0 %v2193
    %2805 = vmatprep.mubr.bf16.mxu0 %v822
    %2806 = vmatmul.mubr.bf16.gmra.mrb[0].mxu0 %v821
    %v2807 = vpop.f32.mrb[0].mxu0
    %v2808 = vadd.f32 %v1156, %v2807
    %v2809 = vpop.f32.mrb[0].mxu0
    %v2810 = vadd.f32 %v1160, %v2809
    %v2811 = vpop.f32.mrb[0].mxu0
    %v2812 = vadd.f32 %v1156, %v2811
    %v2813 = vpop.f32.mrb[0].mxu0
    %v2814 = vadd.f32 %v1160, %v2813
    %2815 = vdwg.mxu0
    %2816 = vmatprep.subr.bf16.mxu0 %v2198
    %2817 = vmatpush1.bf16.msra.mxu0 %v2197
    %2818 = vmatprep.subr.bf16.mxu0 %v2202
    %2819 = vmatpush1.bf16.msra.mxu0 %v2201
    %2820 = vmatprep.subr.bf16.mxu0 %v2206
    %2821 = vmatpush1.bf16.msra.mxu0 %v2205
    %2822 = vmatprep.subr.bf16.mxu0 %v2210
    %2823 = vmatpush1.bf16.msra.mxu0 %v2209
    %2824 = vmatprep.subr.bf16.mxu0 %v2214
    %2825 = vmatpush1.bf16.msra.mxu0 %v2213
    %2826 = vmatprep.subr.bf16.mxu0 %v2218
    %2827 = vmatpush1.bf16.msra.mxu0 %v2217
    %2828 = vmatprep.subr.bf16.mxu0 %v2222
    %2829 = vmatpush1.bf16.msra.mxu0 %v2221
    %2830 = vmatprep.subr.bf16.mxu0 %v2226
    %2831 = vmatpush1.bf16.msra.mxu0 %v2225
    %2832 = vmatprep.subr.bf16.mxu0 %v2230
    %2833 = vmatpush1.bf16.msra.mxu0 %v2229
    %2834 = vmatprep.subr.bf16.mxu0 %v2234
    %2835 = vmatpush1.bf16.msra.mxu0 %v2233
    %2836 = vmatprep.subr.bf16.mxu0 %v2238
    %2837 = vmatpush1.bf16.msra.mxu0 %v2237
    %2838 = vmatprep.subr.bf16.mxu0 %v2242
    %2839 = vmatpush1.bf16.msra.mxu0 %v2241
    %2840 = vmatprep.subr.bf16.mxu0 %v2246
    %2841 = vmatpush1.bf16.msra.mxu0 %v2245
    %2842 = vmatprep.subr.bf16.mxu0 %v2250
    %2843 = vmatpush1.bf16.msra.mxu0 %v2249
    %2844 = vmatprep.subr.bf16.mxu0 %v2254
    %2845 = vmatpush1.bf16.msra.mxu0 %v2253
    %2846 = vmatprep.subr.bf16.mxu0 %v2258
    %2847 = vmatpush1.bf16.msra.mxu0 %v2257
    %2848 = vmatprep.mubr.bf16.mxu0 %v824
    %2849 = vmatmul.mubr.bf16.gmra.mrb[0].mxu0 %v823
    %v2850 = vpop.f32.mrb[0].mxu0
    %v2851 = vadd.f32 %v2808, %v2850
    %v2852 = vpop.f32.mrb[0].mxu0
    %v2853 = vadd.f32 %v2810, %v2852
    %v2854 = vpop.f32.mrb[0].mxu0
    %v2855 = vadd.f32 %v2812, %v2854
    %v2856 = vpop.f32.mrb[0].mxu0
    %v2857 = vadd.f32 %v2814, %v2856
    %2858 = vdwg.mxu0
    %2859 = vmatprep.subr.bf16.mxu0 %v2262
    %2860 = vmatpush1.bf16.msra.mxu0 %v2261
    %2861 = vmatprep.subr.bf16.mxu0 %v2266
    %2862 = vmatpush1.bf16.msra.mxu0 %v2265
    %2863 = vmatprep.subr.bf16.mxu0 %v2270
    %2864 = vmatpush1.bf16.msra.mxu0 %v2269
    %2865 = vmatprep.subr.bf16.mxu0 %v2274
    %2866 = vmatpush1.bf16.msra.mxu0 %v2273
    %2867 = vmatprep.subr.bf16.mxu0 %v2278
    %2868 = vmatpush1.bf16.msra.mxu0 %v2277
    %2869 = vmatprep.subr.bf16.mxu0 %v2282
    %2870 = vmatpush1.bf16.msra.mxu0 %v2281
    %2871 = vmatprep.subr.bf16.mxu0 %v2286
    %2872 = vmatpush1.bf16.msra.mxu0 %v2285
    %2873 = vmatprep.subr.bf16.mxu0 %v2290
    %2874 = vmatpush1.bf16.msra.mxu0 %v2289
    %2875 = vmatprep.subr.bf16.mxu0 %v2294
    %2876 = vmatpush1.bf16.msra.mxu0 %v2293
    %2877 = vmatprep.subr.bf16.mxu0 %v2298
    %2878 = vmatpush1.bf16.msra.mxu0 %v2297
    %2879 = vmatprep.subr.bf16.mxu0 %v2302
    %2880 = vmatpush1.bf16.msra.mxu0 %v2301
    %2881 = vmatprep.subr.bf16.mxu0 %v2306
    %2882 = vmatpush1.bf16.msra.mxu0 %v2305
    %2883 = vmatprep.subr.bf16.mxu0 %v2310
    %2884 = vmatpush1.bf16.msra.mxu0 %v2309
    %2885 = vmatprep.subr.bf16.mxu0 %v2314
    %2886 = vmatpush1.bf16.msra.mxu0 %v2313
    %2887 = vmatprep.subr.bf16.mxu0 %v2318
    %2888 = vmatpush1.bf16.msra.mxu0 %v2317
    %2889 = vmatprep.subr.bf16.mxu0 %v2322
    %2890 = vmatpush1.bf16.msra.mxu0 %v2321
    %2891 = vmatprep.mubr.bf16.mxu0 %v826
    %2892 = vmatmul.mubr.bf16.gmra.mrb[0].mxu0 %v825
    %v2893 = vpop.f32.mrb[0].mxu0
    %v2894 = vadd.f32 %v2851, %v2893
    %v2895 = vpop.f32.mrb[0].mxu0
    %v2896 = vadd.f32 %v2853, %v2895
    %v2897 = vpop.f32.mrb[0].mxu0
    %v2898 = vadd.f32 %v2855, %v2897
    %v2899 = vpop.f32.mrb[0].mxu0
    %v2900 = vadd.f32 %v2857, %v2899
    %2901 = vdwg.mxu0
    %2902 = vmatprep.subr.bf16.mxu0 %v2326
    %2903 = vmatpush1.bf16.msra.mxu0 %v2325
    %2904 = vmatprep.subr.bf16.mxu0 %v2330
    %2905 = vmatpush1.bf16.msra.mxu0 %v2329
    %2906 = vmatprep.subr.bf16.mxu0 %v2334
    %2907 = vmatpush1.bf16.msra.mxu0 %v2333
    %2908 = vmatprep.subr.bf16.mxu0 %v2338
    %2909 = vmatpush1.bf16.msra.mxu0 %v2337
    %2910 = vmatprep.subr.bf16.mxu0 %v2342
    %2911 = vmatpush1.bf16.msra.mxu0 %v2341
    %2912 = vmatprep.subr.bf16.mxu0 %v2346
    %2913 = vmatpush1.bf16.msra.mxu0 %v2345
    %2914 = vmatprep.subr.bf16.mxu0 %v2350
    %2915 = vmatpush1.bf16.msra.mxu0 %v2349
    %2916 = vmatprep.subr.bf16.mxu0 %v2354
    %2917 = vmatpush1.bf16.msra.mxu0 %v2353
    %2918 = vmatprep.subr.bf16.mxu0 %v2358
    %2919 = vmatpush1.bf16.msra.mxu0 %v2357
    %2920 = vmatprep.subr.bf16.mxu0 %v2362
    %2921 = vmatpush1.bf16.msra.mxu0 %v2361
    %2922 = vmatprep.subr.bf16.mxu0 %v2366
    %2923 = vmatpush1.bf16.msra.mxu0 %v2365
    %2924 = vmatprep.subr.bf16.mxu0 %v2370
    %2925 = vmatpush1.bf16.msra.mxu0 %v2369
    %2926 = vmatprep.subr.bf16.mxu0 %v2374
    %2927 = vmatpush1.bf16.msra.mxu0 %v2373
    %2928 = vmatprep.subr.bf16.mxu0 %v2378
    %2929 = vmatpush1.bf16.msra.mxu0 %v2377
    %2930 = vmatprep.subr.bf16.mxu0 %v2382
    %2931 = vmatpush1.bf16.msra.mxu0 %v2381
    %2932 = vmatprep.subr.bf16.mxu0 %v2386
    %2933 = vmatpush1.bf16.msra.mxu0 %v2385
    %2934 = vmatprep.mubr.bf16.mxu0 %v828
    %2935 = vmatmul.mubr.bf16.gmra.mrb[0].mxu0 %v827
    %v2936 = vpop.f32.mrb[0].mxu0
    %v2937 = vadd.f32 %v2894, %v2936
    %v2938 = vpop.f32.mrb[0].mxu0
    %v2939 = vadd.f32 %v2896, %v2938
    %v2940 = vpop.f32.mrb[0].mxu0
    %v2941 = vadd.f32 %v2898, %v2940
    %v2942 = vpop.f32.mrb[0].mxu0
    %v2943 = vadd.f32 %v2900, %v2942
    %2944 = vdwg.mxu0
    %2945 = vmatprep.subr.bf16.mxu0 %v2390
    %2946 = vmatpush1.bf16.msra.mxu0 %v2389
    %2947 = vmatprep.subr.bf16.mxu0 %v2394
    %2948 = vmatpush1.bf16.msra.mxu0 %v2393
    %2949 = vmatprep.subr.bf16.mxu0 %v2398
    %2950 = vmatpush1.bf16.msra.mxu0 %v2397
    %2951 = vmatprep.subr.bf16.mxu0 %v2402
    %2952 = vmatpush1.bf16.msra.mxu0 %v2401
    %2953 = vmatprep.subr.bf16.mxu0 %v2406
    %2954 = vmatpush1.bf16.msra.mxu0 %v2405
    %2955 = vmatprep.subr.bf16.mxu0 %v2410
    %2956 = vmatpush1.bf16.msra.mxu0 %v2409
    %2957 = vmatprep.subr.bf16.mxu0 %v2414
    %2958 = vmatpush1.bf16.msra.mxu0 %v2413
    %2959 = vmatprep.subr.bf16.mxu0 %v2418
    %2960 = vmatpush1.bf16.msra.mxu0 %v2417
    %2961 = vmatprep.subr.bf16.mxu0 %v2422
    %2962 = vmatpush1.bf16.msra.mxu0 %v2421
    %2963 = vmatprep.subr.bf16.mxu0 %v2426
    %2964 = vmatpush1.bf16.msra.mxu0 %v2425
    %2965 = vmatprep.subr.bf16.mxu0 %v2430
    %2966 = vmatpush1.bf16.msra.mxu0 %v2429
    %2967 = vmatprep.subr.bf16.mxu0 %v2434
    %2968 = vmatpush1.bf16.msra.mxu0 %v2433
    %2969 = vmatprep.subr.bf16.mxu0 %v2438
    %2970 = vmatpush1.bf16.msra.mxu0 %v2437
    %2971 = vmatprep.subr.bf16.mxu0 %v2442
    %2972 = vmatpush1.bf16.msra.mxu0 %v2441
    %2973 = vmatprep.subr.bf16.mxu0 %v2446
    %2974 = vmatpush1.bf16.msra.mxu0 %v2445
    %2975 = vmatprep.subr.bf16.mxu0 %v2450
    %2976 = vmatpush1.bf16.msra.mxu0 %v2449
    %2977 = vmatprep.mubr.bf16.mxu0 %v830
    %2978 = vmatmul.mubr.bf16.gmra.mrb[0].mxu0 %v829
    %v2979 = vpop.f32.mrb[0].mxu0
    %v2980 = vadd.f32 %v2937, %v2979
    %v2981 = vpop.f32.mrb[0].mxu0
    %v2982 = vadd.f32 %v2939, %v2981
    %v2983 = vpop.f32.mrb[0].mxu0
    %v2984 = vadd.f32 %v2941, %v2983
    %v2985 = vpop.f32.mrb[0].mxu0
    %v2986 = vadd.f32 %v2943, %v2985
    %2987 = vdwg.mxu0
    %2988 = vmatprep.subr.bf16.mxu0 %v2136
    %2989 = vmatpush1.bf16.msra.mxu0 %v2135
    %2990 = vmatprep.subr.bf16.mxu0 %v2140
    %2991 = vmatpush1.bf16.msra.mxu0 %v2139
    %2992 = vmatprep.subr.bf16.mxu0 %v2144
    %2993 = vmatpush1.bf16.msra.mxu0 %v2143
    %2994 = vmatprep.subr.bf16.mxu0 %v2148
    %2995 = vmatpush1.bf16.msra.mxu0 %v2147
    %2996 = vmatprep.subr.bf16.mxu0 %v2152
    %2997 = vmatpush1.bf16.msra.mxu0 %v2151
    %2998 = vmatprep.subr.bf16.mxu0 %v2156
    %2999 = vmatpush1.bf16.msra.mxu0 %v2155
    %3000 = vmatprep.subr.bf16.mxu0 %v2160
    %3001 = vmatpush1.bf16.msra.mxu0 %v2159
    %3002 = vmatprep.subr.bf16.mxu0 %v2164
    %3003 = vmatpush1.bf16.msra.mxu0 %v2163
    %3004 = vmatprep.subr.bf16.mxu0 %v2168
    %3005 = vmatpush1.bf16.msra.mxu0 %v2167
    %3006 = vmatprep.subr.bf16.mxu0 %v2172
    %3007 = vmatpush1.bf16.msra.mxu0 %v2171
    %3008 = vmatprep.subr.bf16.mxu0 %v2176
    %3009 = vmatpush1.bf16.msra.mxu0 %v2175
    %3010 = vmatprep.subr.bf16.mxu0 %v2180
    %3011 = vmatpush1.bf16.msra.mxu0 %v2179
    %3012 = vmatprep.subr.bf16.mxu0 %v2184
    %3013 = vmatpush1.bf16.msra.mxu0 %v2183
    %3014 = vmatprep.subr.bf16.mxu0 %v2188
    %3015 = vmatpush1.bf16.msra.mxu0 %v2187
    %3016 = vmatprep.subr.bf16.mxu0 %v2192
    %3017 = vmatpush1.bf16.msra.mxu0 %v2191
    %3018 = vmatprep.subr.bf16.mxu0 %v2196
    %3019 = vmatpush1.bf16.msra.mxu0 %v2195
    %3020 = vmatprep.mubr.bf16.mxu0 %v822
    %3021 = vmatmul.mubr.bf16.gmra.mrb[0].mxu0 %v821
    %v3022 = vpop.f32.mrb[0].mxu0
    %v3023 = vadd.f32 %v1164, %v3022
    %v3024 = vpop.f32.mrb[0].mxu0
    %v3025 = vadd.f32 %v1168, %v3024
    %v3026 = vpop.f32.mrb[0].mxu0
    %v3027 = vadd.f32 %v1164, %v3026
    %v3028 = vpop.f32.mrb[0].mxu0
    %v3029 = vadd.f32 %v1168, %v3028
    %3030 = vdwg.mxu0
    %3031 = vmatprep.subr.bf16.mxu0 %v2200
    %3032 = vmatpush1.bf16.msra.mxu0 %v2199
    %3033 = vmatprep.subr.bf16.mxu0 %v2204
    %3034 = vmatpush1.bf16.msra.mxu0 %v2203
    %3035 = vmatprep.subr.bf16.mxu0 %v2208
    %3036 = vmatpush1.bf16.msra.mxu0 %v2207
    %3037 = vmatprep.subr.bf16.mxu0 %v2212
    %3038 = vmatpush1.bf16.msra.mxu0 %v2211
    %3039 = vmatprep.subr.bf16.mxu0 %v2216
    %3040 = vmatpush1.bf16.msra.mxu0 %v2215
    %3041 = vmatprep.subr.bf16.mxu0 %v2220
    %3042 = vmatpush1.bf16.msra.mxu0 %v2219
    %3043 = vmatprep.subr.bf16.mxu0 %v2224
    %3044 = vmatpush1.bf16.msra.mxu0 %v2223
    %3045 = vmatprep.subr.bf16.mxu0 %v2228
    %3046 = vmatpush1.bf16.msra.mxu0 %v2227
    %3047 = vmatprep.subr.bf16.mxu0 %v2232
    %3048 = vmatpush1.bf16.msra.mxu0 %v2231
    %3049 = vmatprep.subr.bf16.mxu0 %v2236
    %3050 = vmatpush1.bf16.msra.mxu0 %v2235
    %3051 = vmatprep.subr.bf16.mxu0 %v2240
    %3052 = vmatpush1.bf16.msra.mxu0 %v2239
    %3053 = vmatprep.subr.bf16.mxu0 %v2244
    %3054 = vmatpush1.bf16.msra.mxu0 %v2243
    %3055 = vmatprep.subr.bf16.mxu0 %v2248
    %3056 = vmatpush1.bf16.msra.mxu0 %v2247
    %3057 = vmatprep.subr.bf16.mxu0 %v2252
    %3058 = vmatpush1.bf16.msra.mxu0 %v2251
    %3059 = vmatprep.subr.bf16.mxu0 %v2256
    %3060 = vmatpush1.bf16.msra.mxu0 %v2255
    %3061 = vmatprep.subr.bf16.mxu0 %v2260
    %3062 = vmatpush1.bf16.msra.mxu0 %v2259
    %3063 = vmatprep.mubr.bf16.mxu0 %v824
    %3064 = vmatmul.mubr.bf16.gmra.mrb[0].mxu0 %v823
    %v3065 = vpop.f32.mrb[0].mxu0
    %v3066 = vadd.f32 %v3023, %v3065
    %v3067 = vpop.f32.mrb[0].mxu0
    %v3068 = vadd.f32 %v3025, %v3067
    %v3069 = vpop.f32.mrb[0].mxu0
    %v3070 = vadd.f32 %v3027, %v3069
    %v3071 = vpop.f32.mrb[0].mxu0
    %v3072 = vadd.f32 %v3029, %v3071
    %3073 = vdwg.mxu0
    %3074 = vmatprep.subr.bf16.mxu0 %v2264
    %3075 = vmatpush1.bf16.msra.mxu0 %v2263
    %3076 = vmatprep.subr.bf16.mxu0 %v2268
    %3077 = vmatpush1.bf16.msra.mxu0 %v2267
    %3078 = vmatprep.subr.bf16.mxu0 %v2272
    %3079 = vmatpush1.bf16.msra.mxu0 %v2271
    %3080 = vmatprep.subr.bf16.mxu0 %v2276
    %3081 = vmatpush1.bf16.msra.mxu0 %v2275
    %3082 = vmatprep.subr.bf16.mxu0 %v2280
    %3083 = vmatpush1.bf16.msra.mxu0 %v2279
    %3084 = vmatprep.subr.bf16.mxu0 %v2284
    %3085 = vmatpush1.bf16.msra.mxu0 %v2283
    %3086 = vmatprep.subr.bf16.mxu0 %v2288
    %3087 = vmatpush1.bf16.msra.mxu0 %v2287
    %3088 = vmatprep.subr.bf16.mxu0 %v2292
    %3089 = vmatpush1.bf16.msra.mxu0 %v2291
    %3090 = vmatprep.subr.bf16.mxu0 %v2296
    %3091 = vmatpush1.bf16.msra.mxu0 %v2295
    %3092 = vmatprep.subr.bf16.mxu0 %v2300
    %3093 = vmatpush1.bf16.msra.mxu0 %v2299
    %3094 = vmatprep.subr.bf16.mxu0 %v2304
    %3095 = vmatpush1.bf16.msra.mxu0 %v2303
    %3096 = vmatprep.subr.bf16.mxu0 %v2308
    %3097 = vmatpush1.bf16.msra.mxu0 %v2307
    %3098 = vmatprep.subr.bf16.mxu0 %v2312
    %3099 = vmatpush1.bf16.msra.mxu0 %v2311
    %3100 = vmatprep.subr.bf16.mxu0 %v2316
    %3101 = vmatpush1.bf16.msra.mxu0 %v2315
    %3102 = vmatprep.subr.bf16.mxu0 %v2320
    %3103 = vmatpush1.bf16.msra.mxu0 %v2319
    %3104 = vmatprep.subr.bf16.mxu0 %v2324
    %3105 = vmatpush1.bf16.msra.mxu0 %v2323
    %3106 = vmatprep.mubr.bf16.mxu0 %v826
    %3107 = vmatmul.mubr.bf16.gmra.mrb[0].mxu0 %v825
    %v3108 = vpop.f32.mrb[0].mxu0
    %v3109 = vadd.f32 %v3066, %v3108
    %v3110 = vpop.f32.mrb[0].mxu0
    %v3111 = vadd.f32 %v3068, %v3110
    %v3112 = vpop.f32.mrb[0].mxu0
    %v3113 = vadd.f32 %v3070, %v3112
    %v3114 = vpop.f32.mrb[0].mxu0
    %v3115 = vadd.f32 %v3072, %v3114
    %3116 = vdwg.mxu0
    %3117 = vmatprep.subr.bf16.mxu0 %v2328
    %3118 = vmatpush1.bf16.msra.mxu0 %v2327
    %3119 = vmatprep.subr.bf16.mxu0 %v2332
    %3120 = vmatpush1.bf16.msra.mxu0 %v2331
    %3121 = vmatprep.subr.bf16.mxu0 %v2336
    %3122 = vmatpush1.bf16.msra.mxu0 %v2335
    %3123 = vmatprep.subr.bf16.mxu0 %v2340
    %3124 = vmatpush1.bf16.msra.mxu0 %v2339
    %3125 = vmatprep.subr.bf16.mxu0 %v2344
    %3126 = vmatpush1.bf16.msra.mxu0 %v2343
    %3127 = vmatprep.subr.bf16.mxu0 %v2348
    %3128 = vmatpush1.bf16.msra.mxu0 %v2347
    %3129 = vmatprep.subr.bf16.mxu0 %v2352
    %3130 = vmatpush1.bf16.msra.mxu0 %v2351
    %3131 = vmatprep.subr.bf16.mxu0 %v2356
    %3132 = vmatpush1.bf16.msra.mxu0 %v2355
    %3133 = vmatprep.subr.bf16.mxu0 %v2360
    %3134 = vmatpush1.bf16.msra.mxu0 %v2359
    %3135 = vmatprep.subr.bf16.mxu0 %v2364
    %3136 = vmatpush1.bf16.msra.mxu0 %v2363
    %3137 = vmatprep.subr.bf16.mxu0 %v2368
    %3138 = vmatpush1.bf16.msra.mxu0 %v2367
    %3139 = vmatprep.subr.bf16.mxu0 %v2372
    %3140 = vmatpush1.bf16.msra.mxu0 %v2371
    %3141 = vmatprep.subr.bf16.mxu0 %v2376
    %3142 = vmatpush1.bf16.msra.mxu0 %v2375
    %3143 = vmatprep.subr.bf16.mxu0 %v2380
    %3144 = vmatpush1.bf16.msra.mxu0 %v2379
    %3145 = vmatprep.subr.bf16.mxu0 %v2384
    %3146 = vmatpush1.bf16.msra.mxu0 %v2383
    %3147 = vmatprep.subr.bf16.mxu0 %v2388
    %3148 = vmatpush1.bf16.msra.mxu0 %v2387
    %3149 = vmatprep.mubr.bf16.mxu0 %v828
    %3150 = vmatmul.mubr.bf16.gmra.mrb[0].mxu0 %v827
    %v3151 = vpop.f32.mrb[0].mxu0
    %v3152 = vadd.f32 %v3109, %v3151
    %v3153 = vpop.f32.mrb[0].mxu0
    %v3154 = vadd.f32 %v3111, %v3153
    %v3155 = vpop.f32.mrb[0].mxu0
    %v3156 = vadd.f32 %v3113, %v3155
    %v3157 = vpop.f32.mrb[0].mxu0
    %v3158 = vadd.f32 %v3115, %v3157
    %3159 = vdwg.mxu0
    %3160 = vmatprep.subr.bf16.mxu0 %v2392
    %3161 = vmatpush1.bf16.msra.mxu0 %v2391
    %3162 = vmatprep.subr.bf16.mxu0 %v2396
    %3163 = vmatpush1.bf16.msra.mxu0 %v2395
    %3164 = vmatprep.subr.bf16.mxu0 %v2400
    %3165 = vmatpush1.bf16.msra.mxu0 %v2399
    %3166 = vmatprep.subr.bf16.mxu0 %v2404
    %3167 = vmatpush1.bf16.msra.mxu0 %v2403
    %3168 = vmatprep.subr.bf16.mxu0 %v2408
    %3169 = vmatpush1.bf16.msra.mxu0 %v2407
    %3170 = vmatprep.subr.bf16.mxu0 %v2412
    %3171 = vmatpush1.bf16.msra.mxu0 %v2411
    %3172 = vmatprep.subr.bf16.mxu0 %v2416
    %3173 = vmatpush1.bf16.msra.mxu0 %v2415
    %3174 = vmatprep.subr.bf16.mxu0 %v2420
    %3175 = vmatpush1.bf16.msra.mxu0 %v2419
    %3176 = vmatprep.subr.bf16.mxu0 %v2424
    %3177 = vmatpush1.bf16.msra.mxu0 %v2423
    %3178 = vmatprep.subr.bf16.mxu0 %v2428
    %3179 = vmatpush1.bf16.msra.mxu0 %v2427
    %3180 = vmatprep.subr.bf16.mxu0 %v2432
    %3181 = vmatpush1.bf16.msra.mxu0 %v2431
    %3182 = vmatprep.subr.bf16.mxu0 %v2436
    %3183 = vmatpush1.bf16.msra.mxu0 %v2435
    %3184 = vmatprep.subr.bf16.mxu0 %v2440
    %3185 = vmatpush1.bf16.msra.mxu0 %v2439
    %3186 = vmatprep.subr.bf16.mxu0 %v2444
    %3187 = vmatpush1.bf16.msra.mxu0 %v2443
    %3188 = vmatprep.subr.bf16.mxu0 %v2448
    %3189 = vmatpush1.bf16.msra.mxu0 %v2447
    %3190 = vmatprep.subr.bf16.mxu0 %v2452
    %3191 = vmatpush1.bf16.msra.mxu0 %v2451
    %3192 = vmatprep.mubr.bf16.mxu0 %v830
    %3193 = vmatmul.mubr.bf16.gmra.mrb[0].mxu0 %v829
    %v3194 = vpop.f32.mrb[0].mxu0
    %v3195 = vadd.f32 %v3152, %v3194
    %v3196 = vpop.f32.mrb[0].mxu0
    %v3197 = vadd.f32 %v3154, %v3196
    %v3198 = vpop.f32.mrb[0].mxu0
    %v3199 = vadd.f32 %v3156, %v3198
    %v3200 = vpop.f32.mrb[0].mxu0
    %v3201 = vadd.f32 %v3158, %v3200
    %3202 = vdwg.mxu0
    %v3203 = vmul.f32 %v735, 224.0
    %v3204 = vmul.f32 %v738, 224.0
    %v3205 = vadd.f32 %v3203, 1e-09
    %v3206 = vadd.f32 %v3204, 1e-09
    %v3207 = vrcp.pop %v3205
    %v3208 = vmul.f32 10000.0, %v3207
    %v3209 = vrcp.pop %v3206
    %v3210 = vmul.f32 10000.0, %v3209
    %3212 = vset.pattern.permute.xlu0 0
    %3213 = vperm.xlu0 %3212, %v3208
    %v3214 = vpop.permute.xlu0 %3213
    %3217 = vset.pattern.permute.xlu0 0
    %3218 = vperm.xlu0 %3217, %v3210
    %v3219 = vpop.permute.xlu0 %3218
    %v3221 = vadd.f32 %v3195, %v3214
    %v3222 = vadd.f32 %v3199, %v3219
    %v3223 = vand.u32 2147483647, %v3221
    %v3224 = vand.u32 2147483647, %v3222
    %vm3225 = vcmp.lt.f32.partialorder %v3223, 1e-06
    %vm3226 = vcmp.lt.f32.partialorder %v3224, 1e-06
    %vm3227 = vcmp.ge.f32.partialorder %v3221, 0.0
    %vm3228 = vcmp.ge.f32.partialorder %v3222, 0.0
    %v3229 = vsel %vm3227, 1e-06, -1e-06
    %v3230 = vsel %vm3228, 1e-06, -1e-06
    %v3231 = vsel %vm3225, %v3229, %v3221
    %v3232 = vsel %vm3226, %v3230, %v3222
    %v3233 = vrcp.pop %v3231
    %v3234 = vrcp.pop %v3232
    %3236 = vset.pattern.permute.xlu0 1
    %3237 = vperm.xlu0 %3236, %v735
    %v3238 = vpop.permute.xlu0 %3237
    %3241 = vset.pattern.permute.xlu0 1
    %3242 = vperm.xlu0 %3241, %v738
    %v3243 = vpop.permute.xlu0 %3242
    %v3245 = vadd.f32 %v2980, %v3238
    %v3246 = vadd.f32 %v2984, %v3243
    %v3247 = vmul.f32 %v3245, 44.642857
    %v3248 = vmul.f32 %v3246, 44.642857
    %v3249 = vmul.f32 %v3247, %v3233
    %v3250 = vmul.f32 %v3248, %v3234
    %3251 = vset.pattern.permute.xlu0 2
    %3252 = vperm.xlu0 %3251, %v735
    %v3253 = vpop.permute.xlu0 %3252
    %3255 = vset.pattern.permute.xlu0 2
    %3256 = vperm.xlu0 %3255, %v738
    %v3257 = vpop.permute.xlu0 %3256
    %v3259 = vadd.f32 %v2982, %v3253
    %v3260 = vadd.f32 %v2986, %v3257
    %v3261 = vmul.f32 %v3259, 44.642857
    %v3262 = vmul.f32 %v3260, 44.642857
    %v3263 = vmul.f32 %v3261, %v3233
    %v3264 = vmul.f32 %v3262, %v3234
    %3265 = vst [vmem:[%s7] sm:$0xff] %v735
    %3266 = vst [vmem:[%s7 + $0x80] sm:$0xff] %v738
    %3267 = vst [vmem:[%s7 + $0x8] sm:$0xff] %v755
    %3268 = vst [vmem:[%s7 + $0x10] sm:$0xff] %v797
    %3269 = vst [vmem:[%s7 + $0x18] sm:$0xff] %v807
    %3270 = vst [vmem:[%s7 + $0x20] sm:$0xff] %v757
    %3271 = vst [vmem:[%s7 + $0x28] sm:$0xff] %v799
    %3272 = vst [vmem:[%s7 + $0x30] sm:$0xff] %v813
    %3273 = vst [vmem:[%s7 + $0x38] sm:$0xff] %v759
    %3274 = vst [vmem:[%s7 + $0x40] sm:$0xff] %v801
    %3275 = vst [vmem:[%s7 + $0x48] sm:$0xff] %v819
    %3276 = vst [vmem:[%s7 + $0x88] sm:$0xff] %v756
    %3277 = vst [vmem:[%s7 + $0x90] sm:$0xff] %v798
    %3278 = vst [vmem:[%s7 + $0x98] sm:$0xff] %v808
    %3279 = vst [vmem:[%s7 + $0xa0] sm:$0xff] %v758
    %3280 = vst [vmem:[%s7 + $0xa8] sm:$0xff] %v800
    %3281 = vst [vmem:[%s7 + $0xb0] sm:$0xff] %v814
    %3282 = vst [vmem:[%s7 + $0xb8] sm:$0xff] %v760
    %3283 = vst [vmem:[%s7 + $0xc0] sm:$0xff] %v802
    %3284 = vst [vmem:[%s7 + $0xc8] sm:$0xff] %v820
    %3285 = vst [vmem:[%s7 + $0x50] sm:$0xff] %v2980
    %3286 = vst [vmem:[%s7 + $0x58] sm:$0xff] %v2982
    %3287 = vst [vmem:[%s7 + $0x60] sm:$0xff] %v3195
    %3288 = vst [vmem:[%s7 + $0x68] sm:$0xff] %v3197
    %3289 = vst [vmem:[%s7 + $0xd0] sm:$0xff] %v2984
    %3290 = vst [vmem:[%s7 + $0xd8] sm:$0xff] %v2986
    %3291 = vst [vmem:[%s7 + $0xe0] sm:$0xff] %v3199
    %3292 = vst [vmem:[%s7 + $0xe8] sm:$0xff] %v3201
    %3293 = vst [vmem:[%s7 + $0x70] sm:$0xff] %v3249
    %3294 = vst [vmem:[%s7 + $0xf0] sm:$0xff] %v3250
    %3295 = vst [vmem:[%s7 + $0x78] sm:$0xff] %v3263
    %3296 = vst [vmem:[%s7 + $0xf8] sm:$0xff] %v3264
    // Predicated region
    $region54: #{meva_demo_forward.1} parent=1 // pred_check
      _
    $region55: #{meva_demo_forward.1} parent=1 // pred_check_branch
      %3298 = sbr.rel (0) target = $region57
    $region56: #{meva_demo_forward.1} parent=1 // pred_region
      _
    $region57: #{meva_demo_forward.1} parent=1 // pred_fallthru
      _
    // Predicated region
    $region58: #{meva_demo_forward.1} parent=1 // pred_check
      _
    $region59: #{meva_demo_forward.1} parent=1 // pred_check_branch
      %3300 = sbr.rel (0) target = $region61
    $region60: #{meva_demo_forward.1} parent=1 // pred_region
      _
    $region61: #{meva_demo_forward.1} parent=1 // pred_fallthru
      _
    %3301 = vsyncpa [#allocation3], 1
    %3302 = vsyncpa [#allocation5], 1
    %3303 = vsyncpa [#allocation8], 1
    %3304 = vsyncpa [#allocation11], 1

</llo_original>
